<compile_context>
chip_gen: v7x
topology: tpu7x:2x2x1
jax: 0.10.0
libtpu: 0.0.40
codegen_flags: <defaults>
</compile_context>

<pallas_src>
import math
import functools

import jax
import jax.numpy as jnp
from jax.experimental import pallas as pl
from jax.experimental.pallas import tpu as pltpu

# ---------------- configuration ----------------
HIDDEN = 32
NUM_HEADS = 4
HEAD_DIM = HIDDEN // NUM_HEADS
LN_EPS = 1e-12
PRE_LAYER_NORM = False  # post-LN (standard BERT residual + LayerNorm)


def _attention_kernel(x_ref, mask_ref, wqkv_ref, bqkv_ref, wo_ref, vec_ref, o_ref):
    """One batch-group per grid step.

    x_ref    : (R, H) f32   flattened (Bt*S, H) activations for this group
    mask_ref : (1, R, R) f32 combined additive mask (BERT key mask + block-diag penalty)
    wqkv_ref : (H, 3H) bf16  fused [Wq^T | Wk^T | Wv^T]
    bqkv_ref : (1, 3H) f32   fused [bq | bk | bv]
    wo_ref   : (H, H) bf16   Wo^T
    vec_ref  : (3, H) f32    rows = [bo, gamma, beta]
    o_ref    : (R, H)        output rows for this group
    """
    R, H = x_ref.shape
    x = x_ref[...].astype(jnp.float32)          # (R, H), kept in f32 for the residual
    mask = mask_ref[0]                          # (R, R) additive mask

    # --- fused QKV projection: bf16 MXU operands, f32 accumulation ---
    qkv = jnp.dot(x.astype(jnp.bfloat16), wqkv_ref[...],
                  preferred_element_type=jnp.float32) + bqkv_ref[...]   # (R, 3H) f32

    scale = 1.0 / math.sqrt(HEAD_DIM)

    vecs = vec_ref[...]                         # (3, H): bo / gamma / beta
    bo = vecs[0:1, :]
    gamma = vecs[1:2, :]
    beta = vecs[2:3, :]

    # --- per-head attention over the whole batch group, accumulated through Wo ---
    out = jnp.zeros((R, H), jnp.float32)
    for h in range(NUM_HEADS):
        lo = h * HEAD_DIM
        qh = qkv[:, lo:lo + HEAD_DIM].astype(jnp.bfloat16)              # (R, dh)
        kh = qkv[:, H + lo:H + lo + HEAD_DIM].astype(jnp.bfloat16)      # (R, dh)
        vh = qkv[:, 2 * H + lo:2 * H + lo + HEAD_DIM].astype(jnp.bfloat16)

        # scores over the whole group; cross-batch pairs are killed by the
        # block-diagonal -1e9 term inside `mask`, masked keys by the -1e4 term.
        s = jax.lax.dot_general(qh, kh, (((1,), (1,)), ((), ())),
                                preferred_element_type=jnp.float32)     # (R, R)
        s = s * scale + mask
        s = s - jnp.max(s, axis=-1, keepdims=True)
        p = jnp.exp(s)
        p = p * pl.reciprocal(jnp.sum(p, axis=-1, keepdims=True), approx=True)

        ctx = jnp.dot(p.astype(jnp.bfloat16), vh,
                      preferred_element_type=jnp.float32)               # (R, dh)
        # accumulate through the matching (sublane-aligned) row block of Wo^T
        out = out + jnp.dot(ctx.astype(jnp.bfloat16),
                            wo_ref[lo:lo + HEAD_DIM, :],
                            preferred_element_type=jnp.float32)         # (R, H)

    # --- output bias + residual, then post-LayerNorm (TF-style, eps inside sqrt) ---
    out = out + bo + x
    u = jnp.mean(out, axis=-1, keepdims=True)
    d = out - u
    var = jnp.mean(d * d, axis=-1, keepdims=True)
    normed = d * jax.lax.rsqrt(var + LN_EPS)
    o_ref[...] = (gamma * normed + beta).astype(o_ref.dtype)


def _pick_batch_tile(B, S, max_rows=128, min_grid=2):
    """Largest divisor of B whose row count Bt*S fits the 128-row MXU target,
    preferring grids with >= 2 steps so both v7x TensorCores get work."""
    candidates = [bt for bt in range(1, B + 1) if B % bt == 0 and bt * S <= max_rows]
    if not candidates:
        return 1
    preferred = [bt for bt in candidates if B // bt >= min_grid]
    return max(preferred) if preferred else max(candidates)


def _pack_params(params):
    """Pack torch-layout params into 4 loop-invariant kernel operands."""
    wqkv_t = jnp.concatenate(
        [params["wq"].T, params["wk"].T, params["wv"].T], axis=1).astype(jnp.bfloat16)  # (H, 3H)
    bqkv = jnp.concatenate(
        [params["bq"], params["bk"], params["bv"]])[None, :].astype(jnp.float32)        # (1, 3H)
    wo_t = params["wo"].T.astype(jnp.bfloat16)                                           # (H, H)
    vecs = jnp.stack([params["bo"], params["gamma"], params["beta"]],
                     axis=0).astype(jnp.float32)                                         # (3, H)
    return wqkv_t, bqkv, wo_t, vecs


@functools.partial(jax.jit, static_argnames=("batch_tile",))
def transformer_attention(x, attention_mask, params, batch_tile=None):
    """x: (B, S, H) f32.  attention_mask: (B, 1, 1, S) additive BERT mask."""
    B, S, H = x.shape
    assert H == HIDDEN

    Bt = _pick_batch_tile(B, S) if batch_tile is None else batch_tile
    assert B % Bt == 0
    G = B // Bt
    R = Bt * S

    wqkv_t, bqkv, wo_t, vecs = _pack_params(params)

    # Combined additive mask per batch group:
    #   key mask (0 / -1e4) for the key's batch  +  -1e9 for cross-batch pairs.
    key_mask = attention_mask.reshape(B, S).astype(jnp.float32).reshape(G, 1, R)
    row_batch = jnp.arange(R, dtype=jnp.int32) // S
    block_pen = jnp.where(row_batch[:, None] == row_batch[None, :],
                          0.0, -1e9).astype(jnp.float32)                 # (R, R)
    combined_mask = key_mask + block_pen[None]                           # (G, R, R)

    x2d = x.reshape(B * S, H).astype(jnp.float32)

    out2d = pl.pallas_call(
        _attention_kernel,
        out_shape=jax.ShapeDtypeStruct((B * S, H), jnp.float32),
        grid_spec=pltpu.PrefetchScalarGridSpec(
            num_scalar_prefetch=0,
            grid=(G,),
            in_specs=[
                pl.BlockSpec((R, H), lambda g: (g, 0)),            # activations rows
                pl.BlockSpec((1, R, R), lambda g: (g, 0, 0)),      # combined mask
                pl.BlockSpec((H, 3 * H), lambda g: (0, 0)),        # fused Wqkv^T (bf16)
                pl.BlockSpec((1, 3 * H), lambda g: (0, 0)),        # fused qkv bias
                pl.BlockSpec((H, H), lambda g: (0, 0)),            # Wo^T (bf16)
                pl.BlockSpec((3, H), lambda g: (0, 0)),            # [bo; gamma; beta]
            ],
            out_specs=pl.BlockSpec((R, H), lambda g: (g, 0)),
        ),
        compiler_params=pltpu.CompilerParams(
            dimension_semantics=("parallel",)),
    )(x2d, combined_mask, wqkv_t, bqkv, wo_t, vecs)

    return out2d.reshape(B, S, H)


def init_params(key, hidden=HIDDEN):
    """Deterministic parameter init, torch nn.Linear layout: W (out, in), b (out,)."""
    keys = jax.random.split(key, 8)
    std = 0.02

    def lin(kw, kb):
        w = std * jax.random.normal(kw, (hidden, hidden), jnp.float32)
        b = std * jax.random.normal(kb, (hidden,), jnp.float32)
        return w, b

    wq, bq = lin(keys[0], keys[1])
    wk, bk = lin(keys[2], keys[3])
    wv, bv = lin(keys[4], keys[5])
    wo, bo = lin(keys[6], keys[7])
    return dict(wq=wq, bq=bq, wk=wk, bk=bk, wv=wv, bv=bv, wo=wo, bo=bo,
                gamma=jnp.ones((hidden,), jnp.float32),
                beta=jnp.zeros((hidden,), jnp.float32))


def reference(x, attention_mask, params):
    """Pure-JAX f32 reference of the PyTorch forward (post-LN, eval mode)."""
    B, S, H = x.shape
    q = x @ params["wq"].T + params["bq"]
    k = x @ params["wk"].T + params["bk"]
    v = x @ params["wv"].T + params["bv"]

    def split(t):
        return t.reshape(B, S, NUM_HEADS, HEAD_DIM).transpose(0, 2, 1, 3)

    qh, kh, vh = split(q), split(k), split(v)
    scores = jnp.einsum("bhqd,bhkd->bhqk", qh, kh) / math.sqrt(HEAD_DIM)
    scores = scores + attention_mask                       # (B,1,1,S) broadcast
    probs = jax.nn.softmax(scores, axis=-1)
    ctx = jnp.einsum("bhqk,bhkd->bhqd", probs, vh)
    ctx = ctx.transpose(0, 2, 1, 3).reshape(B, S, H)
    out = ctx @ params["wo"].T + params["bo"] + x
    u = out.mean(-1, keepdims=True)
    s = ((out - u) ** 2).mean(-1, keepdims=True)
    out = (out - u) / jnp.sqrt(s + LN_EPS)
    return params["gamma"] * out + params["beta"]


if __name__ == "__main__":
    key = jax.random.PRNGKey(0)
    k_x, k_p = jax.random.split(key, 2)

    B, S, H = 8, 8, HIDDEN
    x = jax.random.normal(k_x, (B, S, H), jnp.float32)

    # additive attention mask: mask out the tail of a couple of batch elements
    valid = jnp.ones((B, S), jnp.float32)
    valid = valid.at[1, -2:].set(0.0)
    valid = valid.at[5, -3:].set(0.0)
    attention_mask = (1.0 - valid)[:, None, None, :] * -10000.0   # (B,1,1,S)

    params = init_params(k_p)

    out = transformer_attention(x, attention_mask, params)
    out = jax.block_until_ready(out)

    ref = reference(x, attention_mask, params)
    assert out.shape == (B, S, H)
    max_err = jnp.max(jnp.abs(out - ref))
    # bf16 MXU operands + approx reciprocal => relaxed tolerance vs. f32 reference
    assert jnp.allclose(out, ref, atol=2e-2, rtol=2e-2), f"max err {max_err}"

    print("KERNEL_OK")
</pallas_src>

<mosaic_0001>
module attributes {stable_mosaic.version = 11 : i64} {
  func.func @_attention_kernel(%arg0: i32, %arg1: memref<32x32xf32, #tpu.memory_space<vmem>>, %arg2: memref<1x32x32xf32, #tpu.memory_space<vmem>>, %arg3: memref<32x96xbf16, #tpu.memory_space<vmem>>, %arg4: memref<1x96xf32, #tpu.memory_space<vmem>>, %arg5: memref<32x32xbf16, #tpu.memory_space<vmem>>, %arg6: memref<3x32xf32, #tpu.memory_space<vmem>>, %arg7: memref<32x32xf32, #tpu.memory_space<vmem>>) attributes {dimension_semantics = [#tpu.dimension_semantics<parallel>], iteration_bounds = array<i64: 2>, scalar_prefetch = 0 : i64, scratch_operands = 0 : i64, tpu.core_type = #tpu.core_type<tc>, window_params = [{transform_indices = @transform_0, window_bounds = array<i64: 32, 32>}, {transform_indices = @transform_1, window_bounds = array<i64: 1, 32, 32>}, {pipeline_mode = #tpu.pipeline_mode<synchronous>, transform_indices = @transform_2, window_bounds = array<i64: 32, 96>}, {pipeline_mode = #tpu.pipeline_mode<synchronous>, transform_indices = @transform_3, window_bounds = array<i64: 1, 96>}, {pipeline_mode = #tpu.pipeline_mode<synchronous>, transform_indices = @transform_4, window_bounds = array<i64: 32, 32>}, {pipeline_mode = #tpu.pipeline_mode<synchronous>, transform_indices = @transform_5, window_bounds = array<i64: 3, 32>}, {transform_indices = @transform_6, window_bounds = array<i64: 32, 32>}]} {
    %c0 = arith.constant 0 : index
    %c0_0 = arith.constant 0 : index
    %0 = vector.load %arg1[%c0, %c0_0] : memref<32x32xf32, #tpu.memory_space<vmem>>, vector<32x32xf32>
    %c0_1 = arith.constant 0 : index
    %c0_2 = arith.constant 0 : index
    %c0_3 = arith.constant 0 : index
    %1 = vector.load %arg2[%c0_1, %c0_2, %c0_3] : memref<1x32x32xf32, #tpu.memory_space<vmem>>, vector<1x32x32xf32>
    %2 = vector.shape_cast %1 : vector<1x32x32xf32> to vector<32x32xf32>
    %3 = arith.truncf %0 : vector<32x32xf32> to vector<32x32xbf16>
    %c0_4 = arith.constant 0 : index
    %c0_5 = arith.constant 0 : index
    %4 = vector.load %arg3[%c0_4, %c0_5] : memref<32x96xbf16, #tpu.memory_space<vmem>>, vector<32x96xbf16>
    %cst = arith.constant dense<0.000000e+00> : vector<32x96xf32>
    %5 = tpu.matmul %3, %4, %cst {dimension_numbers = #tpu.dot_dimension_numbers<[1], [0], [0], [1], [0, 0, 1, 1], [], []>} : vector<32x32xbf16>, vector<32x96xbf16>, vector<32x96xf32> -> vector<32x96xf32>
    %c0_6 = arith.constant 0 : index
    %c0_7 = arith.constant 0 : index
    %6 = vector.load %arg4[%c0_6, %c0_7] : memref<1x96xf32, #tpu.memory_space<vmem>>, vector<1x96xf32>
    %7 = vector.broadcast %6 : vector<1x96xf32> to vector<32x96xf32>
    %8 = arith.addf %5, %7 : vector<32x96xf32>
    %c0_8 = arith.constant 0 : index
    %c0_9 = arith.constant 0 : index
    %9 = vector.load %arg6[%c0_8, %c0_9] : memref<3x32xf32, #tpu.memory_space<vmem>>, vector<3x32xf32>
    %10 = vector.extract_strided_slice %9 {offsets = [0, 0], sizes = [1, 32], strides = [1, 1]} : vector<3x32xf32> to vector<1x32xf32>
    %11 = vector.extract_strided_slice %9 {offsets = [1, 0], sizes = [1, 32], strides = [1, 1]} : vector<3x32xf32> to vector<1x32xf32>
    %12 = vector.extract_strided_slice %9 {offsets = [2, 0], sizes = [1, 32], strides = [1, 1]} : vector<3x32xf32> to vector<1x32xf32>
    %cst_10 = arith.constant 0.000000e+00 : f32
    %13 = vector.broadcast %cst_10 : f32 to vector<32x32xf32>
    %14 = vector.extract_strided_slice %8 {offsets = [0, 0], sizes = [32, 8], strides = [1, 1]} : vector<32x96xf32> to vector<32x8xf32>
    %15 = arith.truncf %14 : vector<32x8xf32> to vector<32x8xbf16>
    %16 = vector.extract_strided_slice %8 {offsets = [0, 32], sizes = [32, 8], strides = [1, 1]} : vector<32x96xf32> to vector<32x8xf32>
    %17 = arith.truncf %16 : vector<32x8xf32> to vector<32x8xbf16>
    %18 = vector.extract_strided_slice %8 {offsets = [0, 64], sizes = [32, 8], strides = [1, 1]} : vector<32x96xf32> to vector<32x8xf32>
    %19 = arith.truncf %18 : vector<32x8xf32> to vector<32x8xbf16>
    %cst_11 = arith.constant dense<0.000000e+00> : vector<32x32xf32>
    %20 = tpu.matmul %15, %17, %cst_11 {dimension_numbers = #tpu.dot_dimension_numbers<[1], [1], [0], [0], [0, 0, 1, 0], [], []>} : vector<32x8xbf16>, vector<32x8xbf16>, vector<32x32xf32> -> vector<32x32xf32>
    %cst_12 = arith.constant 0.353553385 : f32
    %21 = vector.broadcast %cst_12 : f32 to vector<32x32xf32>
    %22 = arith.mulf %20, %21 : vector<32x32xf32>
    %23 = arith.addf %22, %2 : vector<32x32xf32>
    %cst_13 = arith.constant dense<0xFF800000> : vector<32xf32>
    %24 = vector.multi_reduction <maximumf>, %23, %cst_13 [1] : vector<32x32xf32> to vector<32xf32>
    %25 = vector.shape_cast %24 : vector<32xf32> to vector<32x1xf32>
    %26 = vector.broadcast %25 : vector<32x1xf32> to vector<32x32xf32>
    %27 = arith.subf %23, %26 : vector<32x32xf32>
    %28 = math.exp %27 : vector<32x32xf32>
    %cst_14 = arith.constant dense<0.000000e+00> : vector<32xf32>
    %29 = vector.multi_reduction <add>, %28, %cst_14 [1] : vector<32x32xf32> to vector<32xf32>
    %30 = vector.shape_cast %29 : vector<32xf32> to vector<32x1xf32>
    %31 = tpu.reciprocal %30 {approx = true} : vector<32x1xf32> -> vector<32x1xf32>
    %32 = vector.broadcast %31 : vector<32x1xf32> to vector<32x32xf32>
    %33 = arith.mulf %28, %32 : vector<32x32xf32>
    %34 = arith.truncf %33 : vector<32x32xf32> to vector<32x32xbf16>
    %cst_15 = arith.constant dense<0.000000e+00> : vector<32x8xf32>
    %35 = tpu.matmul %34, %19, %cst_15 {dimension_numbers = #tpu.dot_dimension_numbers<[1], [0], [0], [1], [0, 0, 1, 1], [], []>} : vector<32x32xbf16>, vector<32x8xbf16>, vector<32x8xf32> -> vector<32x8xf32>
    %36 = arith.truncf %35 : vector<32x8xf32> to vector<32x8xbf16>
    %c0_16 = arith.constant 0 : index
    %c0_17 = arith.constant 0 : index
    %37 = vector.load %arg5[%c0_16, %c0_17] : memref<32x32xbf16, #tpu.memory_space<vmem>>, vector<8x32xbf16>
    %cst_18 = arith.constant dense<0.000000e+00> : vector<32x32xf32>
    %38 = tpu.matmul %36, %37, %cst_18 {dimension_numbers = #tpu.dot_dimension_numbers<[1], [0], [0], [1], [0, 0, 1, 1], [], []>} : vector<32x8xbf16>, vector<8x32xbf16>, vector<32x32xf32> -> vector<32x32xf32>
    %39 = arith.addf %13, %38 : vector<32x32xf32>
    %40 = vector.extract_strided_slice %8 {offsets = [0, 8], sizes = [32, 8], strides = [1, 1]} : vector<32x96xf32> to vector<32x8xf32>
    %41 = arith.truncf %40 : vector<32x8xf32> to vector<32x8xbf16>
    %42 = vector.extract_strided_slice %8 {offsets = [0, 40], sizes = [32, 8], strides = [1, 1]} : vector<32x96xf32> to vector<32x8xf32>
    %43 = arith.truncf %42 : vector<32x8xf32> to vector<32x8xbf16>
    %44 = vector.extract_strided_slice %8 {offsets = [0, 72], sizes = [32, 8], strides = [1, 1]} : vector<32x96xf32> to vector<32x8xf32>
    %45 = arith.truncf %44 : vector<32x8xf32> to vector<32x8xbf16>
    %cst_19 = arith.constant dense<0.000000e+00> : vector<32x32xf32>
    %46 = tpu.matmul %41, %43, %cst_19 {dimension_numbers = #tpu.dot_dimension_numbers<[1], [1], [0], [0], [0, 0, 1, 0], [], []>} : vector<32x8xbf16>, vector<32x8xbf16>, vector<32x32xf32> -> vector<32x32xf32>
    %cst_20 = arith.constant 0.353553385 : f32
    %47 = vector.broadcast %cst_20 : f32 to vector<32x32xf32>
    %48 = arith.mulf %46, %47 : vector<32x32xf32>
    %49 = arith.addf %48, %2 : vector<32x32xf32>
    %cst_21 = arith.constant dense<0xFF800000> : vector<32xf32>
    %50 = vector.multi_reduction <maximumf>, %49, %cst_21 [1] : vector<32x32xf32> to vector<32xf32>
    %51 = vector.shape_cast %50 : vector<32xf32> to vector<32x1xf32>
    %52 = vector.broadcast %51 : vector<32x1xf32> to vector<32x32xf32>
    %53 = arith.subf %49, %52 : vector<32x32xf32>
    %54 = math.exp %53 : vector<32x32xf32>
    %cst_22 = arith.constant dense<0.000000e+00> : vector<32xf32>
    %55 = vector.multi_reduction <add>, %54, %cst_22 [1] : vector<32x32xf32> to vector<32xf32>
    %56 = vector.shape_cast %55 : vector<32xf32> to vector<32x1xf32>
    %57 = tpu.reciprocal %56 {approx = true} : vector<32x1xf32> -> vector<32x1xf32>
    %58 = vector.broadcast %57 : vector<32x1xf32> to vector<32x32xf32>
    %59 = arith.mulf %54, %58 : vector<32x32xf32>
    %60 = arith.truncf %59 : vector<32x32xf32> to vector<32x32xbf16>
    %cst_23 = arith.constant dense<0.000000e+00> : vector<32x8xf32>
    %61 = tpu.matmul %60, %45, %cst_23 {dimension_numbers = #tpu.dot_dimension_numbers<[1], [0], [0], [1], [0, 0, 1, 1], [], []>} : vector<32x32xbf16>, vector<32x8xbf16>, vector<32x8xf32> -> vector<32x8xf32>
    %62 = arith.truncf %61 : vector<32x8xf32> to vector<32x8xbf16>
    %c8 = arith.constant 8 : index
    %c0_24 = arith.constant 0 : index
    %63 = vector.load %arg5[%c8, %c0_24] : memref<32x32xbf16, #tpu.memory_space<vmem>>, vector<8x32xbf16>
    %cst_25 = arith.constant dense<0.000000e+00> : vector<32x32xf32>
    %64 = tpu.matmul %62, %63, %cst_25 {dimension_numbers = #tpu.dot_dimension_numbers<[1], [0], [0], [1], [0, 0, 1, 1], [], []>} : vector<32x8xbf16>, vector<8x32xbf16>, vector<32x32xf32> -> vector<32x32xf32>
    %65 = arith.addf %39, %64 : vector<32x32xf32>
    %66 = vector.extract_strided_slice %8 {offsets = [0, 16], sizes = [32, 8], strides = [1, 1]} : vector<32x96xf32> to vector<32x8xf32>
    %67 = arith.truncf %66 : vector<32x8xf32> to vector<32x8xbf16>
    %68 = vector.extract_strided_slice %8 {offsets = [0, 48], sizes = [32, 8], strides = [1, 1]} : vector<32x96xf32> to vector<32x8xf32>
    %69 = arith.truncf %68 : vector<32x8xf32> to vector<32x8xbf16>
    %70 = vector.extract_strided_slice %8 {offsets = [0, 80], sizes = [32, 8], strides = [1, 1]} : vector<32x96xf32> to vector<32x8xf32>
    %71 = arith.truncf %70 : vector<32x8xf32> to vector<32x8xbf16>
    %cst_26 = arith.constant dense<0.000000e+00> : vector<32x32xf32>
    %72 = tpu.matmul %67, %69, %cst_26 {dimension_numbers = #tpu.dot_dimension_numbers<[1], [1], [0], [0], [0, 0, 1, 0], [], []>} : vector<32x8xbf16>, vector<32x8xbf16>, vector<32x32xf32> -> vector<32x32xf32>
    %cst_27 = arith.constant 0.353553385 : f32
    %73 = vector.broadcast %cst_27 : f32 to vector<32x32xf32>
    %74 = arith.mulf %72, %73 : vector<32x32xf32>
    %75 = arith.addf %74, %2 : vector<32x32xf32>
    %cst_28 = arith.constant dense<0xFF800000> : vector<32xf32>
    %76 = vector.multi_reduction <maximumf>, %75, %cst_28 [1] : vector<32x32xf32> to vector<32xf32>
    %77 = vector.shape_cast %76 : vector<32xf32> to vector<32x1xf32>
    %78 = vector.broadcast %77 : vector<32x1xf32> to vector<32x32xf32>
    %79 = arith.subf %75, %78 : vector<32x32xf32>
    %80 = math.exp %79 : vector<32x32xf32>
    %cst_29 = arith.constant dense<0.000000e+00> : vector<32xf32>
    %81 = vector.multi_reduction <add>, %80, %cst_29 [1] : vector<32x32xf32> to vector<32xf32>
    %82 = vector.shape_cast %81 : vector<32xf32> to vector<32x1xf32>
    %83 = tpu.reciprocal %82 {approx = true} : vector<32x1xf32> -> vector<32x1xf32>
    %84 = vector.broadcast %83 : vector<32x1xf32> to vector<32x32xf32>
    %85 = arith.mulf %80, %84 : vector<32x32xf32>
    %86 = arith.truncf %85 : vector<32x32xf32> to vector<32x32xbf16>
    %cst_30 = arith.constant dense<0.000000e+00> : vector<32x8xf32>
    %87 = tpu.matmul %86, %71, %cst_30 {dimension_numbers = #tpu.dot_dimension_numbers<[1], [0], [0], [1], [0, 0, 1, 1], [], []>} : vector<32x32xbf16>, vector<32x8xbf16>, vector<32x8xf32> -> vector<32x8xf32>
    %88 = arith.truncf %87 : vector<32x8xf32> to vector<32x8xbf16>
    %c16 = arith.constant 16 : index
    %c0_31 = arith.constant 0 : index
    %89 = vector.load %arg5[%c16, %c0_31] : memref<32x32xbf16, #tpu.memory_space<vmem>>, vector<8x32xbf16>
    %cst_32 = arith.constant dense<0.000000e+00> : vector<32x32xf32>
    %90 = tpu.matmul %88, %89, %cst_32 {dimension_numbers = #tpu.dot_dimension_numbers<[1], [0], [0], [1], [0, 0, 1, 1], [], []>} : vector<32x8xbf16>, vector<8x32xbf16>, vector<32x32xf32> -> vector<32x32xf32>
    %91 = arith.addf %65, %90 : vector<32x32xf32>
    %92 = vector.extract_strided_slice %8 {offsets = [0, 24], sizes = [32, 8], strides = [1, 1]} : vector<32x96xf32> to vector<32x8xf32>
    %93 = arith.truncf %92 : vector<32x8xf32> to vector<32x8xbf16>
    %94 = vector.extract_strided_slice %8 {offsets = [0, 56], sizes = [32, 8], strides = [1, 1]} : vector<32x96xf32> to vector<32x8xf32>
    %95 = arith.truncf %94 : vector<32x8xf32> to vector<32x8xbf16>
    %96 = vector.extract_strided_slice %8 {offsets = [0, 88], sizes = [32, 8], strides = [1, 1]} : vector<32x96xf32> to vector<32x8xf32>
    %97 = arith.truncf %96 : vector<32x8xf32> to vector<32x8xbf16>
    %cst_33 = arith.constant dense<0.000000e+00> : vector<32x32xf32>
    %98 = tpu.matmul %93, %95, %cst_33 {dimension_numbers = #tpu.dot_dimension_numbers<[1], [1], [0], [0], [0, 0, 1, 0], [], []>} : vector<32x8xbf16>, vector<32x8xbf16>, vector<32x32xf32> -> vector<32x32xf32>
    %cst_34 = arith.constant 0.353553385 : f32
    %99 = vector.broadcast %cst_34 : f32 to vector<32x32xf32>
    %100 = arith.mulf %98, %99 : vector<32x32xf32>
    %101 = arith.addf %100, %2 : vector<32x32xf32>
    %cst_35 = arith.constant dense<0xFF800000> : vector<32xf32>
    %102 = vector.multi_reduction <maximumf>, %101, %cst_35 [1] : vector<32x32xf32> to vector<32xf32>
    %103 = vector.shape_cast %102 : vector<32xf32> to vector<32x1xf32>
    %104 = vector.broadcast %103 : vector<32x1xf32> to vector<32x32xf32>
    %105 = arith.subf %101, %104 : vector<32x32xf32>
    %106 = math.exp %105 : vector<32x32xf32>
    %cst_36 = arith.constant dense<0.000000e+00> : vector<32xf32>
    %107 = vector.multi_reduction <add>, %106, %cst_36 [1] : vector<32x32xf32> to vector<32xf32>
    %108 = vector.shape_cast %107 : vector<32xf32> to vector<32x1xf32>
    %109 = tpu.reciprocal %108 {approx = true} : vector<32x1xf32> -> vector<32x1xf32>
    %110 = vector.broadcast %109 : vector<32x1xf32> to vector<32x32xf32>
    %111 = arith.mulf %106, %110 : vector<32x32xf32>
    %112 = arith.truncf %111 : vector<32x32xf32> to vector<32x32xbf16>
    %cst_37 = arith.constant dense<0.000000e+00> : vector<32x8xf32>
    %113 = tpu.matmul %112, %97, %cst_37 {dimension_numbers = #tpu.dot_dimension_numbers<[1], [0], [0], [1], [0, 0, 1, 1], [], []>} : vector<32x32xbf16>, vector<32x8xbf16>, vector<32x8xf32> -> vector<32x8xf32>
    %114 = arith.truncf %113 : vector<32x8xf32> to vector<32x8xbf16>
    %c24 = arith.constant 24 : index
    %c0_38 = arith.constant 0 : index
    %115 = vector.load %arg5[%c24, %c0_38] : memref<32x32xbf16, #tpu.memory_space<vmem>>, vector<8x32xbf16>
    %cst_39 = arith.constant dense<0.000000e+00> : vector<32x32xf32>
    %116 = tpu.matmul %114, %115, %cst_39 {dimension_numbers = #tpu.dot_dimension_numbers<[1], [0], [0], [1], [0, 0, 1, 1], [], []>} : vector<32x8xbf16>, vector<8x32xbf16>, vector<32x32xf32> -> vector<32x32xf32>
    %117 = arith.addf %91, %116 : vector<32x32xf32>
    %118 = vector.broadcast %10 : vector<1x32xf32> to vector<32x32xf32>
    %119 = arith.addf %117, %118 : vector<32x32xf32>
    %120 = arith.addf %119, %0 : vector<32x32xf32>
    %cst_40 = arith.constant dense<0.000000e+00> : vector<32xf32>
    %121 = vector.multi_reduction <add>, %120, %cst_40 [1] : vector<32x32xf32> to vector<32xf32>
    %122 = vector.shape_cast %121 : vector<32xf32> to vector<32x1xf32>
    %cst_41 = arith.constant 3.200000e+01 : f32
    %123 = vector.broadcast %cst_41 : f32 to vector<32x1xf32>
    %124 = arith.divf %122, %123 : vector<32x1xf32>
    %125 = vector.broadcast %124 : vector<32x1xf32> to vector<32x32xf32>
    %126 = arith.subf %120, %125 : vector<32x32xf32>
    %127 = arith.mulf %126, %126 : vector<32x32xf32>
    %cst_42 = arith.constant dense<0.000000e+00> : vector<32xf32>
    %128 = vector.multi_reduction <add>, %127, %cst_42 [1] : vector<32x32xf32> to vector<32xf32>
    %129 = vector.shape_cast %128 : vector<32xf32> to vector<32x1xf32>
    %cst_43 = arith.constant 3.200000e+01 : f32
    %130 = vector.broadcast %cst_43 : f32 to vector<32x1xf32>
    %131 = arith.divf %129, %130 : vector<32x1xf32>
    %cst_44 = arith.constant 9.99999996E-13 : f32
    %132 = vector.broadcast %cst_44 : f32 to vector<32x1xf32>
    %133 = arith.addf %131, %132 : vector<32x1xf32>
    %134 = math.rsqrt %133 : vector<32x1xf32>
    %135 = vector.broadcast %134 : vector<32x1xf32> to vector<32x32xf32>
    %136 = arith.mulf %126, %135 : vector<32x32xf32>
    %137 = vector.broadcast %11 : vector<1x32xf32> to vector<32x32xf32>
    %138 = arith.mulf %137, %136 : vector<32x32xf32>
    %139 = vector.broadcast %12 : vector<1x32xf32> to vector<32x32xf32>
    %140 = arith.addf %138, %139 : vector<32x32xf32>
    %c0_45 = arith.constant 0 : index
    %c0_46 = arith.constant 0 : index
    %141 = vector.load %arg7[%c0_45, %c0_46] : memref<32x32xf32, #tpu.memory_space<vmem>>, vector<32x32xf32>
    tpu.vector_store %arg7[%c0_45, %c0_46], %140 {strides = array<i32>} : memref<32x32xf32, #tpu.memory_space<vmem>>, vector<32x32xf32>,
    return
  }
  func.func @transform_0(%arg0: i32) -> (i32, i32) {
    %c0_i32 = arith.constant 0 : i32
    %c0_i32_0 = arith.constant 0 : i32
    return %arg0, %c0_i32 : i32, i32
  }
  func.func @transform_1(%arg0: i32) -> (i32, i32, i32) {
    %c0_i32 = arith.constant 0 : i32
    %c0_i32_0 = arith.constant 0 : i32
    %c0_i32_1 = arith.constant 0 : i32
    return %arg0, %c0_i32, %c0_i32_0 : i32, i32, i32
  }
  func.func @transform_2(%arg0: i32) -> (i32, i32) {
    %c0_i32 = arith.constant 0 : i32
    %c0_i32_0 = arith.constant 0 : i32
    %c0_i32_1 = arith.constant 0 : i32
    return %c0_i32, %c0_i32_0 : i32, i32
  }
  func.func @transform_3(%arg0: i32) -> (i32, i32) {
    %c0_i32 = arith.constant 0 : i32
    %c0_i32_0 = arith.constant 0 : i32
    %c0_i32_1 = arith.constant 0 : i32
    return %c0_i32, %c0_i32_0 : i32, i32
  }
  func.func @transform_4(%arg0: i32) -> (i32, i32) {
    %c0_i32 = arith.constant 0 : i32
    %c0_i32_0 = arith.constant 0 : i32
    %c0_i32_1 = arith.constant 0 : i32
    return %c0_i32, %c0_i32_0 : i32, i32
  }
  func.func @transform_5(%arg0: i32) -> (i32, i32) {
    %c0_i32 = arith.constant 0 : i32
    %c0_i32_0 = arith.constant 0 : i32
    %c0_i32_1 = arith.constant 0 : i32
    return %c0_i32, %c0_i32_0 : i32, i32
  }
  func.func @transform_6(%arg0: i32) -> (i32, i32) {
    %c0_i32 = arith.constant 0 : i32
    %c0_i32_0 = arith.constant 0 : i32
    return %arg0, %c0_i32 : i32, i32
  }
}

</mosaic_0001>

<llo_original>
// kernel: transformer_attention.1
$region0: #{transformer_attention.1}
  #allocation0 [shape = 'u32[]', space=smem, size = 0x4, offset = 0x4, fixed_abs, tag = 'smem constant byte address 0x4 - core index']
  #allocation1 [shape = 'u32[144,128]{1,0:T(1,128)}', space=vmem, size = 0x12000, scoped, tag = 'internal scratch']
  %s0 = inlined_call_operand.vmem [shape: f32[64,32], index: 0, kind: input, shape index: {}]
  %s1 = inlined_call_operand.vmem [shape: f32[2,32,32], index: 1, kind: input, shape index: {}]
  %s2 = inlined_call_operand.vmem [shape: bf16[32,96], index: 2, kind: input, shape index: {}]
  %s3 = inlined_call_operand.vmem [shape: f32[1,96], index: 3, kind: input, shape index: {}]
  %s4 = inlined_call_operand.vmem [shape: bf16[32,32], index: 4, kind: input, shape index: {}]
  %s5 = inlined_call_operand.vmem [shape: f32[3,32], index: 5, kind: input, shape index: {}]
  %s6 = inlined_call_operand.hbm [shape: f32[64,32], index: 6, kind: output, shape index: {}]
  %s7 = sld [smem:[#allocation0]]
  $region57: #{transformer_attention.1} parent=0
    _
  %s9 = ssub.s32 1, %s7
  %s10 = scalar_select 0, %s9, %s7
  $region1: #{transformer_attention.1} parent=0
    #allocation2 [shape = 'u8[32768]{0}', space=vmem, size = 0x8000, scoped, tag = 'output window, operand 0']
    #allocation3 [shape = 's32[2]{0}', space=sflag, size = 0x8, scoped, tag = 'scoped memory for transformer_attention.1']
    %11 = vsyncpa [#allocation3], 0
    %s12 = scalar_lea.sflag [#allocation3], 1
    %13 = vsyncpa %s12, 0
    loop: start=0, step=1, limit=4
    $region2: #{transformer_attention.1} parent=1 // loop_pre_header
      _
    $region3: #{transformer_attention.1} parent=1 // loop_header
      %s15 = sphi 0, %s19
      %p16 = scmp.ge.s32.totalorder %s15, 4
      %s25 = sphi 0, %s27
      %s28 = sphi 0, %s25
      %s29 = sphi 0, %s28
      %s45 = sphi 0, %s29
      %s51 = sphi 0, %s53
      %s54 = sphi 0, %s51
      %s55 = sphi 0, %s54
      %s71 = sphi 0, %s55
      %s75 = sphi 0, %s75
      %s77 = sphi 0, %s75
      %s78 = sphi 0, %s77
      %s92 = sphi 0, %s78
      %s96 = sphi 0, %s96
      %s98 = sphi 0, %s96
      %s99 = sphi 0, %s98
      %s113 = sphi 0, %s99
      %s117 = sphi 0, %s117
      %s119 = sphi 0, %s117
      %s120 = sphi 0, %s119
      %s134 = sphi 0, %s120
      %s138 = sphi 0, %s138
      %s140 = sphi 0, %s138
      %s141 = sphi 0, %s140
      %s155 = sphi 0, %s141
      %s161 = sphi 0, %s163
      %s164 = sphi 0, %s161
      %s165 = sphi 0, %s164
      %s181 = sphi 0, %s165
    $region4: #{transformer_attention.1} parent=1 // loop_header_branch
      %18 = sbr.rel (%p16) target = $region8
    $region5: #{transformer_attention.1} parent=1 // loop_body
      %s20 = ssub.s32 %s15, 1
      %s21 = ssub.s32 %s15, 2
      %s22 = sadd.s32 %s15, 1
      %s23 = ssub.s32 %s15, %s22
      %p24 = scmp.eq.s32.totalorder %s23, 0
      %s26 = sadd.s32 %s25, 1
      %s27 = scalar_select %p24, %s25, %s26
      %p30 = pneg %p24
      %p31 = scmp.eq.s32.totalorder %s15, 1
      %p32 = por %p30, %p31
      %p33 = scmp.ne.s32.totalorder %s25, %s28
      %p34 = scmp.eq.s32.totalorder %s15, 0
      %p35 = por %p33, %p34
      %p36 = scmp.ne.s32.totalorder %s25, %s28
      %p37 = scmp.eq.s32.totalorder %s20, 1
      %p38 = por %p36, %p37
      %p39 = scmp.ne.s32.totalorder %s28, %s29
      %p40 = scmp.eq.s32.totalorder %s20, 0
      %p41 = por %p39, %p40
      %p42 = scmp.ne.s32.totalorder %s28, %s29
      %p43 = scmp.eq.s32.totalorder %s21, 1
      %p44 = por %p42, %p43
      %p46 = scmp.ne.s32.totalorder %s29, %s45
      %p47 = scmp.eq.s32.totalorder %s21, 0
      %p48 = por %p46, %p47
      %s49 = ssub.s32 %s15, %s22
      %p50 = scmp.eq.s32.totalorder %s49, 0
      %s52 = sadd.s32 %s51, 1
      %s53 = scalar_select %p50, %s51, %s52
      %p56 = pneg %p50
      %p57 = scmp.eq.s32.totalorder %s15, 1
      %p58 = por %p56, %p57
      %p59 = scmp.ne.s32.totalorder %s51, %s54
      %p60 = scmp.eq.s32.totalorder %s15, 0
      %p61 = por %p59, %p60
      %p62 = scmp.ne.s32.totalorder %s51, %s54
      %p63 = scmp.eq.s32.totalorder %s20, 1
      %p64 = por %p62, %p63
      %p65 = scmp.ne.s32.totalorder %s54, %s55
      %p66 = scmp.eq.s32.totalorder %s20, 0
      %p67 = por %p65, %p66
      %p68 = scmp.ne.s32.totalorder %s54, %s55
      %p69 = scmp.eq.s32.totalorder %s21, 1
      %p70 = por %p68, %p69
      %p72 = scmp.ne.s32.totalorder %s55, %s71
      %p73 = scmp.eq.s32.totalorder %s21, 0
      %p74 = por %p72, %p73
      %s76 = sadd.s32 %s75, 1
      %p79 = scmp.eq.s32.totalorder %s15, 1
      %p80 = scmp.ne.s32.totalorder %s75, %s77
      %p81 = scmp.eq.s32.totalorder %s15, 0
      %p82 = por %p80, %p81
      %p83 = scmp.ne.s32.totalorder %s75, %s77
      %p84 = scmp.eq.s32.totalorder %s20, 1
      %p85 = por %p83, %p84
      %p86 = scmp.ne.s32.totalorder %s77, %s78
      %p87 = scmp.eq.s32.totalorder %s20, 0
      %p88 = por %p86, %p87
      %p89 = scmp.ne.s32.totalorder %s77, %s78
      %p90 = scmp.eq.s32.totalorder %s21, 1
      %p91 = por %p89, %p90
      %p93 = scmp.ne.s32.totalorder %s78, %s92
      %p94 = scmp.eq.s32.totalorder %s21, 0
      %p95 = por %p93, %p94
      %s97 = sadd.s32 %s96, 1
      %p100 = scmp.eq.s32.totalorder %s15, 1
      %p101 = scmp.ne.s32.totalorder %s96, %s98
      %p102 = scmp.eq.s32.totalorder %s15, 0
      %p103 = por %p101, %p102
      %p104 = scmp.ne.s32.totalorder %s96, %s98
      %p105 = scmp.eq.s32.totalorder %s20, 1
      %p106 = por %p104, %p105
      %p107 = scmp.ne.s32.totalorder %s98, %s99
      %p108 = scmp.eq.s32.totalorder %s20, 0
      %p109 = por %p107, %p108
      %p110 = scmp.ne.s32.totalorder %s98, %s99
      %p111 = scmp.eq.s32.totalorder %s21, 1
      %p112 = por %p110, %p111
      %p114 = scmp.ne.s32.totalorder %s99, %s113
      %p115 = scmp.eq.s32.totalorder %s21, 0
      %p116 = por %p114, %p115
      %s118 = sadd.s32 %s117, 1
      %p121 = scmp.eq.s32.totalorder %s15, 1
      %p122 = scmp.ne.s32.totalorder %s117, %s119
      %p123 = scmp.eq.s32.totalorder %s15, 0
      %p124 = por %p122, %p123
      %p125 = scmp.ne.s32.totalorder %s117, %s119
      %p126 = scmp.eq.s32.totalorder %s20, 1
      %p127 = por %p125, %p126
      %p128 = scmp.ne.s32.totalorder %s119, %s120
      %p129 = scmp.eq.s32.totalorder %s20, 0
      %p130 = por %p128, %p129
      %p131 = scmp.ne.s32.totalorder %s119, %s120
      %p132 = scmp.eq.s32.totalorder %s21, 1
      %p133 = por %p131, %p132
      %p135 = scmp.ne.s32.totalorder %s120, %s134
      %p136 = scmp.eq.s32.totalorder %s21, 0
      %p137 = por %p135, %p136
      %s139 = sadd.s32 %s138, 1
      %p142 = scmp.eq.s32.totalorder %s15, 1
      %p143 = scmp.ne.s32.totalorder %s138, %s140
      %p144 = scmp.eq.s32.totalorder %s15, 0
      %p145 = por %p143, %p144
      %p146 = scmp.ne.s32.totalorder %s138, %s140
      %p147 = scmp.eq.s32.totalorder %s20, 1
      %p148 = por %p146, %p147
      %p149 = scmp.ne.s32.totalorder %s140, %s141
      %p150 = scmp.eq.s32.totalorder %s20, 0
      %p151 = por %p149, %p150
      %p152 = scmp.ne.s32.totalorder %s140, %s141
      %p153 = scmp.eq.s32.totalorder %s21, 1
      %p154 = por %p152, %p153
      %p156 = scmp.ne.s32.totalorder %s141, %s155
      %p157 = scmp.eq.s32.totalorder %s21, 0
      %p158 = por %p156, %p157
      %s159 = ssub.s32 %s15, %s22
      %p160 = scmp.eq.s32.totalorder %s159, 0
      %s162 = sadd.s32 %s161, 1
      %s163 = scalar_select %p160, %s161, %s162
      %p166 = pneg %p160
      %p167 = scmp.eq.s32.totalorder %s15, 1
      %p168 = por %p166, %p167
      %p169 = scmp.ne.s32.totalorder %s161, %s164
      %p170 = scmp.eq.s32.totalorder %s15, 0
      %p171 = por %p169, %p170
      %p172 = scmp.ne.s32.totalorder %s161, %s164
      %p173 = scmp.eq.s32.totalorder %s20, 1
      %p174 = por %p172, %p173
      %p175 = scmp.ne.s32.totalorder %s164, %s165
      %p176 = scmp.eq.s32.totalorder %s20, 0
      %p177 = por %p175, %p176
      %p178 = scmp.ne.s32.totalorder %s164, %s165
      %p179 = scmp.eq.s32.totalorder %s21, 1
      %p180 = por %p178, %p179
      %p182 = scmp.ne.s32.totalorder %s165, %s181
      %p183 = scmp.eq.s32.totalorder %s21, 0
      %p184 = por %p182, %p183
      %p185 = scmp.le.s32.totalorder 1, %s15
      %p186 = scmp.lt.s32.totalorder %s15, 3
      %p187 = pnand %p185, %p186
      %p188 = pneg %p187
      // Predicated region
      $region9: #{transformer_attention.1} parent=5 // pred_check
        _
      $region10: #{transformer_attention.1} parent=5 // pred_check_branch
        %190 = sbr.rel (%p187) target = $region12
      $region11: #{transformer_attention.1} parent=5 // pred_region
        %s191 = ssub.s32 %s15, 1
        // Predicated region
        $region13: #{transformer_attention.1} parent=11 // pred_check
          %p192 = pneg %p88
        $region14: #{transformer_attention.1} parent=11 // pred_check_branch
          %194 = sbr.rel (%p192) target = $region16
        $region15: #{transformer_attention.1} parent=11 // pred_region
          _
        $region16: #{transformer_attention.1} parent=11 // pred_fallthru
          _
        // Predicated region
        $region17: #{transformer_attention.1} parent=11 // pred_check
          %p195 = pneg %p109
        $region18: #{transformer_attention.1} parent=11 // pred_check_branch
          %197 = sbr.rel (%p195) target = $region20
        $region19: #{transformer_attention.1} parent=11 // pred_region
          _
        $region20: #{transformer_attention.1} parent=11 // pred_fallthru
          _
        // Predicated region
        $region21: #{transformer_attention.1} parent=11 // pred_check
          %p198 = pneg %p130
        $region22: #{transformer_attention.1} parent=11 // pred_check_branch
          %200 = sbr.rel (%p198) target = $region24
        $region23: #{transformer_attention.1} parent=11 // pred_region
          _
        $region24: #{transformer_attention.1} parent=11 // pred_fallthru
          _
        // Predicated region
        $region25: #{transformer_attention.1} parent=11 // pred_check
          %p201 = pneg %p151
        $region26: #{transformer_attention.1} parent=11 // pred_check_branch
          %203 = sbr.rel (%p201) target = $region28
        $region27: #{transformer_attention.1} parent=11 // pred_region
          _
        $region28: #{transformer_attention.1} parent=11 // pred_fallthru
          _
      $region12: #{transformer_attention.1} parent=5 // pred_fallthru
        _
      %p204 = scmp.lt.s32.totalorder %s15, 2
      // Predicated region
      $region29: #{transformer_attention.1} parent=5 // pred_check
        %p205 = pneg %p204
      $region30: #{transformer_attention.1} parent=5 // pred_check_branch
        %207 = sbr.rel (%p205) target = $region32
      $region31: #{transformer_attention.1} parent=5 // pred_region
        // Predicated region
        $region33: #{transformer_attention.1} parent=31 // pred_check
          %p208 = pneg %p35
        $region34: #{transformer_attention.1} parent=31 // pred_check_branch
          %210 = sbr.rel (%p208) target = $region36
        $region35: #{transformer_attention.1} parent=31 // pred_region
          %s211 = smul.u32 4, %s15
          %p212 = scmp.lt.s32.totalorder %s211, 7
          %s213 = scalar_select %p212, %s211, 7
          %s214 = smul.addr %s213, 8
          %s215 = scalar_lea.vmem %s0, %s214
          %s216 = smul.u32 4, %s15
        $region36: #{transformer_attention.1} parent=31 // pred_fallthru
          _
        // Predicated region
        $region37: #{transformer_attention.1} parent=31 // pred_check
          %p217 = pneg %p61
        $region38: #{transformer_attention.1} parent=31 // pred_check_branch
          %219 = sbr.rel (%p217) target = $region40
        $region39: #{transformer_attention.1} parent=31 // pred_region
          %p220 = scmp.lt.s32.totalorder %s15, 1
          %s221 = scalar_select %p220, %s15, 1
          %s222 = smul.addr %s221, 4
          %s223 = smul.addr %s222, 8
          %s224 = scalar_lea.vmem %s1, %s223
        $region40: #{transformer_attention.1} parent=31 // pred_fallthru
          _
      $region32: #{transformer_attention.1} parent=5 // pred_fallthru
        _
      %p225 = scmp.le.s32.totalorder 1, %s15
      %p226 = scmp.lt.s32.totalorder %s15, 3
      %p227 = pnand %p225, %p226
      %p228 = pneg %p227
      // Predicated region
      $region41: #{transformer_attention.1} parent=5 // pred_check
        _
      $region42: #{transformer_attention.1} parent=5 // pred_check_branch
        %230 = sbr.rel (%p227) target = $region44
      $region43: #{transformer_attention.1} parent=5 // pred_region
        %s231 = ssub.s32 %s15, 1
        %s232 = smul.u32 4, %s20
        %p233 = scmp.lt.s32.totalorder %s232, 7
        %s234 = scalar_select %p233, %s232, 7
        %s235 = smul.addr %s234, 8
        %s236 = scalar_lea.vmem %s0, %s235
        %p237 = pneg %p41
        %p238 = pneg %p38
        %p239 = scmp.lt.s32.totalorder %s20, 1
        %s240 = scalar_select %p239, %s20, 1
        %s241 = smul.addr %s240, 4
        %s242 = smul.addr %s241, 8
        %s243 = scalar_lea.vmem %s1, %s242
        %p244 = pneg %p67
        %p245 = pneg %p64
        %p246 = pneg %p88
        %p247 = pneg %p85
        %p248 = pneg %p109
        %p249 = pneg %p106
        %p250 = pneg %p130
        %p251 = pneg %p127
        %p252 = pneg %p151
        %p253 = pneg %p148
        %p254 = pneg %p177
        %p255 = pneg %p174
        %s256 = sand.u32 %s164, 1
        %s257 = scalar_lea.sflag [#allocation3], %s256
        %s258 = sand.u32 %s164, 1
        %s259 = smul.addr %s258, 32
        %s260 = scalar_lea.vmem [#allocation2], %s259
        %s261 = smul.u32 4, %s20
        %p262 = scmp.lt.s32.totalorder %s261, 7
        %s263 = scalar_select %p262, %s261, 7
        %s264 = smul.addr %s263, 8
        %s265 = scalar_lea.vmem %s0, %s264
        %s266 = smul.u32 4, %s20
        %p267 = scmp.lt.s32.totalorder %s20, 1
        %s268 = scalar_select %p267, %s20, 1
        %s269 = smul.addr %s268, 4
        %s270 = smul.addr %s269, 8
        %s271 = scalar_lea.vmem %s1, %s270
        %s272 = smul.u32 4, %s20
        %v274 = vld [vmem:[%s265] sm:$0xff]
        %v275 = vld [vmem:[%s265 + $0x8] sm:$0xff]
        %v276 = vld [vmem:[%s265 + $0x10] sm:$0xff]
        %v277 = vld [vmem:[%s265 + $0x18] sm:$0xff]
        %v278 = vld [vmem:[%s271] sm:$0xff]
        %v279 = vld [vmem:[%s271 + $0x8] sm:$0xff]
        %v280 = vld [vmem:[%s271 + $0x10] sm:$0xff]
        %v281 = vld [vmem:[%s271 + $0x18] sm:$0xff]
        %v282 = vpack.c.bf16 %v275, %v274
        %v283 = vpack.c.bf16 %v277, %v276
        %v284 = vld [vmem:[%s2] sm:$0xf]
        %v285 = vld [vmem:[%s2 + $0x4] sm:$0xf]
        %v286 = vld [vmem:[%s2 + $0x8] sm:$0xf]
        %v287 = vld [vmem:[%s2 + $0xc] sm:$0xf]
        %v288 = vld [vmem:[%s3] sm:$0x1]
        %v290 = vlaneseq
        %v291 = vshrl.u32 %v290, 7
        %v292 = vsub.s32 0, %v291
        %v293 = vrot.slane %v288, %v292
        %v299 = vunpack.c.l.b16 %v284
        %v300 = vunpack.c.l.b16 %v285
        %v301 = vunpack.c.l.b16 %v286
        %v302 = vunpack.c.l.b16 %v287
        %v303 = vpack.c.b16 %v300, %v299
        %v304 = vpack.c.b16 %v302, %v301
        %vm307 = vcmask 261120
        %v309 = vsel %vm307, %v282, 0
        %v312 = vsel %vm307, %v283, 0
        %314 = vmatprep.subr.bf16.mxu0 0
        %315 = vmatpush1.bf16.msra.mxu0 %v303
        %316 = vmatprep.subr.bf16.mxu0 0
        %317 = vmatpush1.bf16.msra.mxu0 %v304
        %318 = vmatprep.subr.bf16.mxu0 0
        %319 = vmatpush1.bf16.msra.mxu0 0
        %320 = vmatprep.subr.bf16.mxu0 0
        %321 = vmatpush1.bf16.msra.mxu0 0
        %322 = vmatprep.subr.bf16.mxu0 0
        %323 = vmatpush1.bf16.msra.mxu0 0
        %324 = vmatprep.subr.bf16.mxu0 0
        %325 = vmatpush1.bf16.msra.mxu0 0
        %326 = vmatprep.subr.bf16.mxu0 0
        %327 = vmatpush1.bf16.msra.mxu0 0
        %328 = vmatprep.subr.bf16.mxu0 0
        %329 = vmatpush1.bf16.msra.mxu0 0
        %330 = vmatprep.subr.bf16.mxu0 0
        %331 = vmatpush1.bf16.msra.mxu0 0
        %332 = vmatprep.subr.bf16.mxu0 0
        %333 = vmatpush1.bf16.msra.mxu0 0
        %334 = vmatprep.subr.bf16.mxu0 0
        %335 = vmatpush1.bf16.msra.mxu0 0
        %336 = vmatprep.subr.bf16.mxu0 0
        %337 = vmatpush1.bf16.msra.mxu0 0
        %338 = vmatprep.subr.bf16.mxu0 0
        %339 = vmatpush1.bf16.msra.mxu0 0
        %340 = vmatprep.subr.bf16.mxu0 0
        %341 = vmatpush1.bf16.msra.mxu0 0
        %342 = vmatprep.subr.bf16.mxu0 0
        %343 = vmatpush1.bf16.msra.mxu0 0
        %344 = vmatprep.subr.bf16.mxu0 0
        %345 = vmatpush1.bf16.msra.mxu0 0
        %346 = vmatprep.mubr.bf16.mxu0 0
        %347 = vmatmul.mubr.bf16.gmra.mrb[0].mxu0 %v309
        %v348 = vpop.f32.mrb[0].mxu0
        %v349 = vadd.f32 %v293, %v348
        %v350 = vpop.f32.mrb[0].mxu0
        %v351 = vpop.f32.mrb[0].mxu0
        %v352 = vadd.f32 %v293, %v351
        %v353 = vpop.f32.mrb[0].mxu0
        %354 = vmatprep.mubr.bf16.mxu0 0
        %355 = vmatmul.mubr.bf16.gmra.mrb[0].mxu0 %v312
        %v356 = vpop.f32.mrb[0].mxu0
        %v357 = vadd.f32 %v293, %v356
        %v358 = vpop.f32.mrb[0].mxu0
        %v359 = vpop.f32.mrb[0].mxu0
        %v360 = vadd.f32 %v293, %v359
        %v361 = vpop.f32.mrb[0].mxu0
        %362 = vdwg.mxu0
        %v363 = vld [vmem:[%s5] sm:$0x7]
        %v364 = vpack.c.bf16 %v352, %v349
        %v365 = vpack.c.bf16 %v360, %v357
        %368 = vrot.lane.b32.xlu0 %v364, 96
        %v369 = vpop.permute.xlu0 %368
        %370 = vrot.lane.b32.xlu0 %v365, 96
        %v371 = vpop.permute.xlu0 %370
        %vm372 = vcmask 64512
        %v374 = vsel %vm372, %v364, 0
        %v377 = vsel %vm372, %v365, 0
        %v380 = vsel %vm372, %v369, 0
        %v383 = vsel %vm372, %v371, 0
        %385 = vmatprep.subr.bf16.mxu0 0
        %386 = vmatpush1.bf16.xpose.msra.mxu0 %v380
        %387 = vmatprep.subr.bf16.mxu0 0
        %388 = vmatpush1.bf16.xpose.msra.mxu0 %v383
        %389 = vmatprep.subr.bf16.mxu0 0
        %390 = vmatpush1.bf16.xpose.msra.mxu0 0
        %391 = vmatprep.subr.bf16.mxu0 0
        %392 = vmatpush1.bf16.xpose.msra.mxu0 0
        %393 = vmatprep.subr.bf16.mxu0 0
        %394 = vmatpush1.bf16.xpose.msra.mxu0 0
        %395 = vmatprep.subr.bf16.mxu0 0
        %396 = vmatpush1.bf16.xpose.msra.mxu0 0
        %397 = vmatprep.subr.bf16.mxu0 0
        %398 = vmatpush1.bf16.xpose.msra.mxu0 0
        %399 = vmatprep.subr.bf16.mxu0 0
        %400 = vmatpush1.bf16.xpose.msra.mxu0 0
        %401 = vmatprep.subr.bf16.mxu0 0
        %402 = vmatpush1.bf16.xpose.msra.mxu0 0
        %403 = vmatprep.subr.bf16.mxu0 0
        %404 = vmatpush1.bf16.xpose.msra.mxu0 0
        %405 = vmatprep.subr.bf16.mxu0 0
        %406 = vmatpush1.bf16.xpose.msra.mxu0 0
        %407 = vmatprep.subr.bf16.mxu0 0
        %408 = vmatpush1.bf16.xpose.msra.mxu0 0
        %409 = vmatprep.subr.bf16.mxu0 0
        %410 = vmatpush1.bf16.xpose.msra.mxu0 0
        %411 = vmatprep.subr.bf16.mxu0 0
        %412 = vmatpush1.bf16.xpose.msra.mxu0 0
        %413 = vmatprep.subr.bf16.mxu0 0
        %414 = vmatpush1.bf16.xpose.msra.mxu0 0
        %415 = vmatprep.subr.bf16.mxu0 0
        %416 = vmatpush1.bf16.xpose.msra.mxu0 0
        %417 = vmatprep.mubr.bf16.mxu0 0
        %418 = vmatmul.mubr.bf16.gmra.mrb[0].mxu0 %v374
        %v419 = vpop.f32.mrb[0].mxu0
        %v420 = vadd.f32 0.0, %v419
        %v421 = vpop.f32.mrb[0].mxu0
        %v422 = vpop.f32.mrb[0].mxu0
        %v423 = vadd.f32 0.0, %v422
        %v424 = vpop.f32.mrb[0].mxu0
        %425 = vmatprep.mubr.bf16.mxu0 0
        %426 = vmatmul.mubr.bf16.gmra.mrb[0].mxu0 %v377
        %v427 = vpop.f32.mrb[0].mxu0
        %v428 = vadd.f32 0.0, %v427
        %v429 = vpop.f32.mrb[0].mxu0
        %v430 = vpop.f32.mrb[0].mxu0
        %v431 = vadd.f32 0.0, %v430
        %v432 = vpop.f32.mrb[0].mxu0
        %433 = vdwg.mxu0
        %v434 = vmul.f32 %v420, 0.35355338
        %v435 = vmul.f32 %v423, 0.35355338
        %v436 = vmul.f32 %v428, 0.35355338
        %v437 = vmul.f32 %v431, 0.35355338
        %v438 = vadd.f32 %v434, %v278
        %v439 = vadd.f32 %v435, %v279
        %v440 = vadd.f32 %v436, %v280
        %v441 = vadd.f32 %v437, %v281
        %v442 = vsel %vm307, %v438, -inf
        %443 = vmax.xlane.f32.xlu0 %v442
        %v444 = vpop.xlane.xlu0 %443
        %v445 = vsel %vm307, %v439, -inf
        %446 = vmax.xlane.f32.xlu0 %v445
        %v447 = vpop.xlane.xlu0 %446
        %v448 = vsel %vm307, %v440, -inf
        %449 = vmax.xlane.f32.xlu0 %v448
        %v450 = vpop.xlane.xlu0 %449
        %v451 = vsel %vm307, %v441, -inf
        %452 = vmax.xlane.f32.xlu0 %v451
        %v453 = vpop.xlane.xlu0 %452
        %v454 = vsub.f32 %v438, %v444
        %v455 = vsub.f32 %v439, %v447
        %v456 = vsub.f32 %v440, %v450
        %v457 = vsub.f32 %v441, %v453
        %v458 = vmul.f32 %v454, 1.442695
        %v459 = vpow.pop %v458
        %v460 = vmul.f32 %v455, 1.442695
        %v461 = vpow.pop %v460
        %v462 = vmul.f32 %v456, 1.442695
        %v463 = vpow.pop %v462
        %v464 = vmul.f32 %v457, 1.442695
        %v465 = vpow.pop %v464
        %v466 = vsel %vm307, %v459, 0.0
        %467 = vadd.xlane.f32.xlu0 %v466
        %v468 = vpop.xlane.xlu0 %467
        %v469 = vsel %vm307, %v461, 0.0
        %470 = vadd.xlane.f32.xlu0 %v469
        %v471 = vpop.xlane.xlu0 %470
        %v472 = vsel %vm307, %v463, 0.0
        %473 = vadd.xlane.f32.xlu0 %v472
        %v474 = vpop.xlane.xlu0 %473
        %v475 = vsel %vm307, %v465, 0.0
        %476 = vadd.xlane.f32.xlu0 %v475
        %v477 = vpop.xlane.xlu0 %476
        %v478 = vrcp.pop %v468
        %v479 = vrcp.pop %v471
        %v480 = vrcp.pop %v474
        %v481 = vrcp.pop %v477
        %v482 = vmul.f32 %v459, %v478
        %v483 = vmul.f32 %v461, %v479
        %v484 = vmul.f32 %v463, %v480
        %v485 = vmul.f32 %v465, %v481
        %v486 = vpack.c.bf16 %v483, %v482
        %v487 = vpack.c.bf16 %v485, %v484
        %488 = vrot.lane.b32.xlu0 %v364, 64
        %v489 = vpop.permute.xlu0 %488
        %490 = vrot.lane.b32.xlu0 %v365, 64
        %v491 = vpop.permute.xlu0 %490
        %v495 = vsel %vm307, %v486, 0
        %v498 = vsel %vm307, %v487, 0
        %500 = vmatprep.subr.bf16.mxu0 0
        %501 = vmatpush1.bf16.msra.mxu0 %v489
        %502 = vmatprep.subr.bf16.mxu0 0
        %503 = vmatpush1.bf16.msra.mxu0 %v491
        %504 = vmatprep.subr.bf16.mxu0 0
        %505 = vmatpush1.bf16.msra.mxu0 0
        %506 = vmatprep.subr.bf16.mxu0 0
        %507 = vmatpush1.bf16.msra.mxu0 0
        %508 = vmatprep.subr.bf16.mxu0 0
        %509 = vmatpush1.bf16.msra.mxu0 0
        %510 = vmatprep.subr.bf16.mxu0 0
        %511 = vmatpush1.bf16.msra.mxu0 0
        %512 = vmatprep.subr.bf16.mxu0 0
        %513 = vmatpush1.bf16.msra.mxu0 0
        %514 = vmatprep.subr.bf16.mxu0 0
        %515 = vmatpush1.bf16.msra.mxu0 0
        %516 = vmatprep.subr.bf16.mxu0 0
        %517 = vmatpush1.bf16.msra.mxu0 0
        %518 = vmatprep.subr.bf16.mxu0 0
        %519 = vmatpush1.bf16.msra.mxu0 0
        %520 = vmatprep.subr.bf16.mxu0 0
        %521 = vmatpush1.bf16.msra.mxu0 0
        %522 = vmatprep.subr.bf16.mxu0 0
        %523 = vmatpush1.bf16.msra.mxu0 0
        %524 = vmatprep.subr.bf16.mxu0 0
        %525 = vmatpush1.bf16.msra.mxu0 0
        %526 = vmatprep.subr.bf16.mxu0 0
        %527 = vmatpush1.bf16.msra.mxu0 0
        %528 = vmatprep.subr.bf16.mxu0 0
        %529 = vmatpush1.bf16.msra.mxu0 0
        %530 = vmatprep.subr.bf16.mxu0 0
        %531 = vmatpush1.bf16.msra.mxu0 0
        %532 = vmatprep.mubr.bf16.mxu0 0
        %533 = vmatmul.mubr.bf16.gmra.mrb[0].mxu0 %v495
        %v534 = vpop.f32.mrb[0].mxu0
        %v535 = vadd.f32 0.0, %v534
        %v536 = vpop.f32.mrb[0].mxu0
        %v537 = vpop.f32.mrb[0].mxu0
        %v538 = vadd.f32 0.0, %v537
        %v539 = vpop.f32.mrb[0].mxu0
        %540 = vmatprep.mubr.bf16.mxu0 0
        %541 = vmatmul.mubr.bf16.gmra.mrb[0].mxu0 %v498
        %v542 = vpop.f32.mrb[0].mxu0
        %v543 = vadd.f32 0.0, %v542
        %v544 = vpop.f32.mrb[0].mxu0
        %v545 = vpop.f32.mrb[0].mxu0
        %v546 = vadd.f32 0.0, %v545
        %v547 = vpop.f32.mrb[0].mxu0
        %548 = vdwg.mxu0
        %v549 = vpack.c.bf16 %v538, %v535
        %v550 = vpack.c.bf16 %v546, %v543
        %v551 = vld [vmem:[%s4] sm:$0xf]
        %552 = vrot.lane.b32.xlu0 %v364, 120
        %v553 = vpop.permute.xlu0 %552
        %554 = vrot.lane.b32.xlu0 %v365, 120
        %v555 = vpop.permute.xlu0 %554
        %556 = vrot.lane.b32.xlu0 %v364, 88
        %v557 = vpop.permute.xlu0 %556
        %558 = vrot.lane.b32.xlu0 %v365, 88
        %v559 = vpop.permute.xlu0 %558
        %v561 = vsel %vm372, %v553, 0
        %v564 = vsel %vm372, %v555, 0
        %v567 = vsel %vm372, %v557, 0
        %v570 = vsel %vm372, %v559, 0
        %572 = vmatprep.subr.bf16.mxu0 0
        %573 = vmatpush1.bf16.xpose.msra.mxu0 %v567
        %574 = vmatprep.subr.bf16.mxu0 0
        %575 = vmatpush1.bf16.xpose.msra.mxu0 %v570
        %576 = vmatprep.subr.bf16.mxu0 0
        %577 = vmatpush1.bf16.xpose.msra.mxu0 0
        %578 = vmatprep.subr.bf16.mxu0 0
        %579 = vmatpush1.bf16.xpose.msra.mxu0 0
        %580 = vmatprep.subr.bf16.mxu0 0
        %581 = vmatpush1.bf16.xpose.msra.mxu0 0
        %582 = vmatprep.subr.bf16.mxu0 0
        %583 = vmatpush1.bf16.xpose.msra.mxu0 0
        %584 = vmatprep.subr.bf16.mxu0 0
        %585 = vmatpush1.bf16.xpose.msra.mxu0 0
        %586 = vmatprep.subr.bf16.mxu0 0
        %587 = vmatpush1.bf16.xpose.msra.mxu0 0
        %588 = vmatprep.subr.bf16.mxu0 0
        %589 = vmatpush1.bf16.xpose.msra.mxu0 0
        %590 = vmatprep.subr.bf16.mxu0 0
        %591 = vmatpush1.bf16.xpose.msra.mxu0 0
        %592 = vmatprep.subr.bf16.mxu0 0
        %593 = vmatpush1.bf16.xpose.msra.mxu0 0
        %594 = vmatprep.subr.bf16.mxu0 0
        %595 = vmatpush1.bf16.xpose.msra.mxu0 0
        %596 = vmatprep.subr.bf16.mxu0 0
        %597 = vmatpush1.bf16.xpose.msra.mxu0 0
        %598 = vmatprep.subr.bf16.mxu0 0
        %599 = vmatpush1.bf16.xpose.msra.mxu0 0
        %600 = vmatprep.subr.bf16.mxu0 0
        %601 = vmatpush1.bf16.xpose.msra.mxu0 0
        %602 = vmatprep.subr.bf16.mxu0 0
        %603 = vmatpush1.bf16.xpose.msra.mxu0 0
        %604 = vmatprep.mubr.bf16.mxu0 0
        %605 = vmatmul.mubr.bf16.gmra.mrb[0].mxu0 %v561
        %v606 = vpop.f32.mrb[0].mxu0
        %v607 = vadd.f32 0.0, %v606
        %v608 = vpop.f32.mrb[0].mxu0
        %v609 = vpop.f32.mrb[0].mxu0
        %v610 = vadd.f32 0.0, %v609
        %v611 = vpop.f32.mrb[0].mxu0
        %612 = vmatprep.mubr.bf16.mxu0 0
        %613 = vmatmul.mubr.bf16.gmra.mrb[0].mxu0 %v564
        %v614 = vpop.f32.mrb[0].mxu0
        %v615 = vadd.f32 0.0, %v614
        %v616 = vpop.f32.mrb[0].mxu0
        %v617 = vpop.f32.mrb[0].mxu0
        %v618 = vadd.f32 0.0, %v617
        %v619 = vpop.f32.mrb[0].mxu0
        %620 = vdwg.mxu0
        %v621 = vmul.f32 %v607, 0.35355338
        %v622 = vmul.f32 %v610, 0.35355338
        %v623 = vmul.f32 %v615, 0.35355338
        %v624 = vmul.f32 %v618, 0.35355338
        %v625 = vadd.f32 %v621, %v278
        %v626 = vadd.f32 %v622, %v279
        %v627 = vadd.f32 %v623, %v280
        %v628 = vadd.f32 %v624, %v281
        %v629 = vsel %vm307, %v625, -inf
        %630 = vmax.xlane.f32.xlu0 %v629
        %v631 = vpop.xlane.xlu0 %630
        %v632 = vsel %vm307, %v626, -inf
        %633 = vmax.xlane.f32.xlu0 %v632
        %v634 = vpop.xlane.xlu0 %633
        %v635 = vsel %vm307, %v627, -inf
        %636 = vmax.xlane.f32.xlu0 %v635
        %v637 = vpop.xlane.xlu0 %636
        %v638 = vsel %vm307, %v628, -inf
        %639 = vmax.xlane.f32.xlu0 %v638
        %v640 = vpop.xlane.xlu0 %639
        %v641 = vsub.f32 %v625, %v631
        %v642 = vsub.f32 %v626, %v634
        %v643 = vsub.f32 %v627, %v637
        %v644 = vsub.f32 %v628, %v640
        %v645 = vmul.f32 %v641, 1.442695
        %v646 = vpow.pop %v645
        %v647 = vmul.f32 %v642, 1.442695
        %v648 = vpow.pop %v647
        %v649 = vmul.f32 %v643, 1.442695
        %v650 = vpow.pop %v649
        %v651 = vmul.f32 %v644, 1.442695
        %v652 = vpow.pop %v651
        %v653 = vsel %vm307, %v646, 0.0
        %654 = vadd.xlane.f32.xlu0 %v653
        %v655 = vpop.xlane.xlu0 %654
        %v656 = vsel %vm307, %v648, 0.0
        %657 = vadd.xlane.f32.xlu0 %v656
        %v658 = vpop.xlane.xlu0 %657
        %v659 = vsel %vm307, %v650, 0.0
        %660 = vadd.xlane.f32.xlu0 %v659
        %v661 = vpop.xlane.xlu0 %660
        %v662 = vsel %vm307, %v652, 0.0
        %663 = vadd.xlane.f32.xlu0 %v662
        %v664 = vpop.xlane.xlu0 %663
        %v665 = vrcp.pop %v655
        %v666 = vrcp.pop %v658
        %v667 = vrcp.pop %v661
        %v668 = vrcp.pop %v664
        %v669 = vmul.f32 %v646, %v665
        %v670 = vmul.f32 %v648, %v666
        %v671 = vmul.f32 %v650, %v667
        %v672 = vmul.f32 %v652, %v668
        %v673 = vpack.c.bf16 %v670, %v669
        %v674 = vpack.c.bf16 %v672, %v671
        %675 = vrot.lane.b32.xlu0 %v364, 56
        %v676 = vpop.permute.xlu0 %675
        %677 = vrot.lane.b32.xlu0 %v365, 56
        %v678 = vpop.permute.xlu0 %677
        %v682 = vsel %vm307, %v673, 0
        %v685 = vsel %vm307, %v674, 0
        %687 = vmatprep.subr.bf16.mxu0 0
        %688 = vmatpush1.bf16.msra.mxu0 %v676
        %689 = vmatprep.subr.bf16.mxu0 0
        %690 = vmatpush1.bf16.msra.mxu0 %v678
        %691 = vmatprep.subr.bf16.mxu0 0
        %692 = vmatpush1.bf16.msra.mxu0 0
        %693 = vmatprep.subr.bf16.mxu0 0
        %694 = vmatpush1.bf16.msra.mxu0 0
        %695 = vmatprep.subr.bf16.mxu0 0
        %696 = vmatpush1.bf16.msra.mxu0 0
        %697 = vmatprep.subr.bf16.mxu0 0
        %698 = vmatpush1.bf16.msra.mxu0 0
        %699 = vmatprep.subr.bf16.mxu0 0
        %700 = vmatpush1.bf16.msra.mxu0 0
        %701 = vmatprep.subr.bf16.mxu0 0
        %702 = vmatpush1.bf16.msra.mxu0 0
        %703 = vmatprep.subr.bf16.mxu0 0
        %704 = vmatpush1.bf16.msra.mxu0 0
        %705 = vmatprep.subr.bf16.mxu0 0
        %706 = vmatpush1.bf16.msra.mxu0 0
        %707 = vmatprep.subr.bf16.mxu0 0
        %708 = vmatpush1.bf16.msra.mxu0 0
        %709 = vmatprep.subr.bf16.mxu0 0
        %710 = vmatpush1.bf16.msra.mxu0 0
        %711 = vmatprep.subr.bf16.mxu0 0
        %712 = vmatpush1.bf16.msra.mxu0 0
        %713 = vmatprep.subr.bf16.mxu0 0
        %714 = vmatpush1.bf16.msra.mxu0 0
        %715 = vmatprep.subr.bf16.mxu0 0
        %716 = vmatpush1.bf16.msra.mxu0 0
        %717 = vmatprep.subr.bf16.mxu0 0
        %718 = vmatpush1.bf16.msra.mxu0 0
        %719 = vmatprep.mubr.bf16.mxu0 0
        %720 = vmatmul.mubr.bf16.gmra.mrb[0].mxu0 %v682
        %v721 = vpop.f32.mrb[0].mxu0
        %v722 = vadd.f32 0.0, %v721
        %v723 = vpop.f32.mrb[0].mxu0
        %v724 = vpop.f32.mrb[0].mxu0
        %v725 = vadd.f32 0.0, %v724
        %v726 = vpop.f32.mrb[0].mxu0
        %727 = vmatprep.mubr.bf16.mxu0 0
        %728 = vmatmul.mubr.bf16.gmra.mrb[0].mxu0 %v685
        %v729 = vpop.f32.mrb[0].mxu0
        %v730 = vadd.f32 0.0, %v729
        %v731 = vpop.f32.mrb[0].mxu0
        %v732 = vpop.f32.mrb[0].mxu0
        %v733 = vadd.f32 0.0, %v732
        %v734 = vpop.f32.mrb[0].mxu0
        %735 = vdwg.mxu0
        %v736 = vpack.c.bf16 %v725, %v722
        %v737 = vpack.c.bf16 %v733, %v730
        %v738 = vld [vmem:[%s4 + $0x4] sm:$0xf]
        %v740 = vsel %vm372, %v736, 0
        %v743 = vsel %vm372, %v737, 0
        %vm745 = vcmask 1043456
        %v747 = vsel %vm745, %v738, 0
        %749 = vmatprep.subr.bf16.mxu0 0
        %750 = vmatpush1.bf16.msra.mxu0 %v747
        %751 = vmatprep.subr.bf16.mxu0 0
        %752 = vmatpush1.bf16.msra.mxu0 0
        %753 = vmatprep.subr.bf16.mxu0 0
        %754 = vmatpush1.bf16.msra.mxu0 0
        %755 = vmatprep.subr.bf16.mxu0 0
        %756 = vmatpush1.bf16.msra.mxu0 0
        %757 = vmatprep.subr.bf16.mxu0 0
        %758 = vmatpush1.bf16.msra.mxu0 0
        %759 = vmatprep.subr.bf16.mxu0 0
        %760 = vmatpush1.bf16.msra.mxu0 0
        %761 = vmatprep.subr.bf16.mxu0 0
        %762 = vmatpush1.bf16.msra.mxu0 0
        %763 = vmatprep.subr.bf16.mxu0 0
        %764 = vmatpush1.bf16.msra.mxu0 0
        %765 = vmatprep.subr.bf16.mxu0 0
        %766 = vmatpush1.bf16.msra.mxu0 0
        %767 = vmatprep.subr.bf16.mxu0 0
        %768 = vmatpush1.bf16.msra.mxu0 0
        %769 = vmatprep.subr.bf16.mxu0 0
        %770 = vmatpush1.bf16.msra.mxu0 0
        %771 = vmatprep.subr.bf16.mxu0 0
        %772 = vmatpush1.bf16.msra.mxu0 0
        %773 = vmatprep.subr.bf16.mxu0 0
        %774 = vmatpush1.bf16.msra.mxu0 0
        %775 = vmatprep.subr.bf16.mxu0 0
        %776 = vmatpush1.bf16.msra.mxu0 0
        %777 = vmatprep.subr.bf16.mxu0 0
        %778 = vmatpush1.bf16.msra.mxu0 0
        %779 = vmatprep.subr.bf16.mxu0 0
        %780 = vmatpush1.bf16.msra.mxu0 0
        %781 = vmatprep.mubr.bf16.mxu0 0
        %782 = vmatmul.mubr.bf16.gmra.mrb[0].mxu0 %v740
        %v783 = vpop.f32.mrb[0].mxu0
        %v784 = vadd.f32 0.0, %v783
        %v785 = vpop.f32.mrb[0].mxu0
        %v786 = vpop.f32.mrb[0].mxu0
        %v787 = vadd.f32 0.0, %v786
        %v788 = vpop.f32.mrb[0].mxu0
        %789 = vmatprep.mubr.bf16.mxu0 0
        %790 = vmatmul.mubr.bf16.gmra.mrb[0].mxu0 %v743
        %v791 = vpop.f32.mrb[0].mxu0
        %v792 = vadd.f32 0.0, %v791
        %v793 = vpop.f32.mrb[0].mxu0
        %v794 = vpop.f32.mrb[0].mxu0
        %v795 = vadd.f32 0.0, %v794
        %v796 = vpop.f32.mrb[0].mxu0
        %797 = vdwg.mxu0
        %v799 = vsel %vm372, %v549, 0
        %v802 = vsel %vm372, %v550, 0
        %v805 = vsel %vm745, %v551, 0
        %807 = vmatprep.subr.bf16.mxu0 0
        %808 = vmatpush1.bf16.msra.mxu0 %v805
        %809 = vmatprep.subr.bf16.mxu0 0
        %810 = vmatpush1.bf16.msra.mxu0 0
        %811 = vmatprep.subr.bf16.mxu0 0
        %812 = vmatpush1.bf16.msra.mxu0 0
        %813 = vmatprep.subr.bf16.mxu0 0
        %814 = vmatpush1.bf16.msra.mxu0 0
        %815 = vmatprep.subr.bf16.mxu0 0
        %816 = vmatpush1.bf16.msra.mxu0 0
        %817 = vmatprep.subr.bf16.mxu0 0
        %818 = vmatpush1.bf16.msra.mxu0 0
        %819 = vmatprep.subr.bf16.mxu0 0
        %820 = vmatpush1.bf16.msra.mxu0 0
        %821 = vmatprep.subr.bf16.mxu0 0
        %822 = vmatpush1.bf16.msra.mxu0 0
        %823 = vmatprep.subr.bf16.mxu0 0
        %824 = vmatpush1.bf16.msra.mxu0 0
        %825 = vmatprep.subr.bf16.mxu0 0
        %826 = vmatpush1.bf16.msra.mxu0 0
        %827 = vmatprep.subr.bf16.mxu0 0
        %828 = vmatpush1.bf16.msra.mxu0 0
        %829 = vmatprep.subr.bf16.mxu0 0
        %830 = vmatpush1.bf16.msra.mxu0 0
        %831 = vmatprep.subr.bf16.mxu0 0
        %832 = vmatpush1.bf16.msra.mxu0 0
        %833 = vmatprep.subr.bf16.mxu0 0
        %834 = vmatpush1.bf16.msra.mxu0 0
        %835 = vmatprep.subr.bf16.mxu0 0
        %836 = vmatpush1.bf16.msra.mxu0 0
        %837 = vmatprep.subr.bf16.mxu0 0
        %838 = vmatpush1.bf16.msra.mxu0 0
        %839 = vmatprep.mubr.bf16.mxu0 0
        %840 = vmatmul.mubr.bf16.gmra.mrb[0].mxu0 %v799
        %v841 = vpop.f32.mrb[0].mxu0
        %v842 = vadd.f32 %v784, %v841
        %v843 = vpop.f32.mrb[0].mxu0
        %v844 = vpop.f32.mrb[0].mxu0
        %v845 = vadd.f32 %v787, %v844
        %v846 = vpop.f32.mrb[0].mxu0
        %847 = vmatprep.mubr.bf16.mxu0 0
        %848 = vmatmul.mubr.bf16.gmra.mrb[0].mxu0 %v802
        %v849 = vpop.f32.mrb[0].mxu0
        %v850 = vadd.f32 %v792, %v849
        %v851 = vpop.f32.mrb[0].mxu0
        %v852 = vpop.f32.mrb[0].mxu0
        %v853 = vadd.f32 %v795, %v852
        %v854 = vpop.f32.mrb[0].mxu0
        %855 = vdwg.mxu0
        %856 = vrot.lane.b32.xlu0 %v364, 112
        %v857 = vpop.permute.xlu0 %856
        %858 = vrot.lane.b32.xlu0 %v365, 112
        %v859 = vpop.permute.xlu0 %858
        %860 = vrot.lane.b32.xlu0 %v364, 80
        %v861 = vpop.permute.xlu0 %860
        %862 = vrot.lane.b32.xlu0 %v365, 80
        %v863 = vpop.permute.xlu0 %862
        %v865 = vsel %vm372, %v857, 0
        %v868 = vsel %vm372, %v859, 0
        %v871 = vsel %vm372, %v861, 0
        %v874 = vsel %vm372, %v863, 0
        %876 = vmatprep.subr.bf16.mxu0 0
        %877 = vmatpush1.bf16.xpose.msra.mxu0 %v871
        %878 = vmatprep.subr.bf16.mxu0 0
        %879 = vmatpush1.bf16.xpose.msra.mxu0 %v874
        %880 = vmatprep.subr.bf16.mxu0 0
        %881 = vmatpush1.bf16.xpose.msra.mxu0 0
        %882 = vmatprep.subr.bf16.mxu0 0
        %883 = vmatpush1.bf16.xpose.msra.mxu0 0
        %884 = vmatprep.subr.bf16.mxu0 0
        %885 = vmatpush1.bf16.xpose.msra.mxu0 0
        %886 = vmatprep.subr.bf16.mxu0 0
        %887 = vmatpush1.bf16.xpose.msra.mxu0 0
        %888 = vmatprep.subr.bf16.mxu0 0
        %889 = vmatpush1.bf16.xpose.msra.mxu0 0
        %890 = vmatprep.subr.bf16.mxu0 0
        %891 = vmatpush1.bf16.xpose.msra.mxu0 0
        %892 = vmatprep.subr.bf16.mxu0 0
        %893 = vmatpush1.bf16.xpose.msra.mxu0 0
        %894 = vmatprep.subr.bf16.mxu0 0
        %895 = vmatpush1.bf16.xpose.msra.mxu0 0
        %896 = vmatprep.subr.bf16.mxu0 0
        %897 = vmatpush1.bf16.xpose.msra.mxu0 0
        %898 = vmatprep.subr.bf16.mxu0 0
        %899 = vmatpush1.bf16.xpose.msra.mxu0 0
        %900 = vmatprep.subr.bf16.mxu0 0
        %901 = vmatpush1.bf16.xpose.msra.mxu0 0
        %902 = vmatprep.subr.bf16.mxu0 0
        %903 = vmatpush1.bf16.xpose.msra.mxu0 0
        %904 = vmatprep.subr.bf16.mxu0 0
        %905 = vmatpush1.bf16.xpose.msra.mxu0 0
        %906 = vmatprep.subr.bf16.mxu0 0
        %907 = vmatpush1.bf16.xpose.msra.mxu0 0
        %908 = vmatprep.mubr.bf16.mxu0 0
        %909 = vmatmul.mubr.bf16.gmra.mrb[0].mxu0 %v865
        %v910 = vpop.f32.mrb[0].mxu0
        %v911 = vadd.f32 0.0, %v910
        %v912 = vpop.f32.mrb[0].mxu0
        %v913 = vpop.f32.mrb[0].mxu0
        %v914 = vadd.f32 0.0, %v913
        %v915 = vpop.f32.mrb[0].mxu0
        %916 = vmatprep.mubr.bf16.mxu0 0
        %917 = vmatmul.mubr.bf16.gmra.mrb[0].mxu0 %v868
        %v918 = vpop.f32.mrb[0].mxu0
        %v919 = vadd.f32 0.0, %v918
        %v920 = vpop.f32.mrb[0].mxu0
        %v921 = vpop.f32.mrb[0].mxu0
        %v922 = vadd.f32 0.0, %v921
        %v923 = vpop.f32.mrb[0].mxu0
        %924 = vdwg.mxu0
        %v925 = vmul.f32 %v911, 0.35355338
        %v926 = vmul.f32 %v914, 0.35355338
        %v927 = vmul.f32 %v919, 0.35355338
        %v928 = vmul.f32 %v922, 0.35355338
        %v929 = vadd.f32 %v925, %v278
        %v930 = vadd.f32 %v926, %v279
        %v931 = vadd.f32 %v927, %v280
        %v932 = vadd.f32 %v928, %v281
        %v933 = vsel %vm307, %v929, -inf
        %934 = vmax.xlane.f32.xlu0 %v933
        %v935 = vpop.xlane.xlu0 %934
        %v936 = vsel %vm307, %v930, -inf
        %937 = vmax.xlane.f32.xlu0 %v936
        %v938 = vpop.xlane.xlu0 %937
        %v939 = vsel %vm307, %v931, -inf
        %940 = vmax.xlane.f32.xlu0 %v939
        %v941 = vpop.xlane.xlu0 %940
        %v942 = vsel %vm307, %v932, -inf
        %943 = vmax.xlane.f32.xlu0 %v942
        %v944 = vpop.xlane.xlu0 %943
        %v945 = vsub.f32 %v929, %v935
        %v946 = vsub.f32 %v930, %v938
        %v947 = vsub.f32 %v931, %v941
        %v948 = vsub.f32 %v932, %v944
        %v949 = vmul.f32 %v945, 1.442695
        %v950 = vpow.pop %v949
        %v951 = vmul.f32 %v946, 1.442695
        %v952 = vpow.pop %v951
        %v953 = vmul.f32 %v947, 1.442695
        %v954 = vpow.pop %v953
        %v955 = vmul.f32 %v948, 1.442695
        %v956 = vpow.pop %v955
        %v957 = vsel %vm307, %v950, 0.0
        %958 = vadd.xlane.f32.xlu0 %v957
        %v959 = vpop.xlane.xlu0 %958
        %v960 = vsel %vm307, %v952, 0.0
        %961 = vadd.xlane.f32.xlu0 %v960
        %v962 = vpop.xlane.xlu0 %961
        %v963 = vsel %vm307, %v954, 0.0
        %964 = vadd.xlane.f32.xlu0 %v963
        %v965 = vpop.xlane.xlu0 %964
        %v966 = vsel %vm307, %v956, 0.0
        %967 = vadd.xlane.f32.xlu0 %v966
        %v968 = vpop.xlane.xlu0 %967
        %v969 = vrcp.pop %v959
        %v970 = vrcp.pop %v962
        %v971 = vrcp.pop %v965
        %v972 = vrcp.pop %v968
        %v973 = vmul.f32 %v950, %v969
        %v974 = vmul.f32 %v952, %v970
        %v975 = vmul.f32 %v954, %v971
        %v976 = vmul.f32 %v956, %v972
        %v977 = vpack.c.bf16 %v974, %v973
        %v978 = vpack.c.bf16 %v976, %v975
        %979 = vrot.lane.b32.xlu0 %v364, 48
        %v980 = vpop.permute.xlu0 %979
        %981 = vrot.lane.b32.xlu0 %v365, 48
        %v982 = vpop.permute.xlu0 %981
        %v986 = vsel %vm307, %v977, 0
        %v989 = vsel %vm307, %v978, 0
        %991 = vmatprep.subr.bf16.mxu0 0
        %992 = vmatpush1.bf16.msra.mxu0 %v980
        %993 = vmatprep.subr.bf16.mxu0 0
        %994 = vmatpush1.bf16.msra.mxu0 %v982
        %995 = vmatprep.subr.bf16.mxu0 0
        %996 = vmatpush1.bf16.msra.mxu0 0
        %997 = vmatprep.subr.bf16.mxu0 0
        %998 = vmatpush1.bf16.msra.mxu0 0
        %999 = vmatprep.subr.bf16.mxu0 0
        %1000 = vmatpush1.bf16.msra.mxu0 0
        %1001 = vmatprep.subr.bf16.mxu0 0
        %1002 = vmatpush1.bf16.msra.mxu0 0
        %1003 = vmatprep.subr.bf16.mxu0 0
        %1004 = vmatpush1.bf16.msra.mxu0 0
        %1005 = vmatprep.subr.bf16.mxu0 0
        %1006 = vmatpush1.bf16.msra.mxu0 0
        %1007 = vmatprep.subr.bf16.mxu0 0
        %1008 = vmatpush1.bf16.msra.mxu0 0
        %1009 = vmatprep.subr.bf16.mxu0 0
        %1010 = vmatpush1.bf16.msra.mxu0 0
        %1011 = vmatprep.subr.bf16.mxu0 0
        %1012 = vmatpush1.bf16.msra.mxu0 0
        %1013 = vmatprep.subr.bf16.mxu0 0
        %1014 = vmatpush1.bf16.msra.mxu0 0
        %1015 = vmatprep.subr.bf16.mxu0 0
        %1016 = vmatpush1.bf16.msra.mxu0 0
        %1017 = vmatprep.subr.bf16.mxu0 0
        %1018 = vmatpush1.bf16.msra.mxu0 0
        %1019 = vmatprep.subr.bf16.mxu0 0
        %1020 = vmatpush1.bf16.msra.mxu0 0
        %1021 = vmatprep.subr.bf16.mxu0 0
        %1022 = vmatpush1.bf16.msra.mxu0 0
        %1023 = vmatprep.mubr.bf16.mxu0 0
        %1024 = vmatmul.mubr.bf16.gmra.mrb[0].mxu0 %v986
        %v1025 = vpop.f32.mrb[0].mxu0
        %v1026 = vadd.f32 0.0, %v1025
        %v1027 = vpop.f32.mrb[0].mxu0
        %v1028 = vpop.f32.mrb[0].mxu0
        %v1029 = vadd.f32 0.0, %v1028
        %v1030 = vpop.f32.mrb[0].mxu0
        %1031 = vmatprep.mubr.bf16.mxu0 0
        %1032 = vmatmul.mubr.bf16.gmra.mrb[0].mxu0 %v989
        %v1033 = vpop.f32.mrb[0].mxu0
        %v1034 = vadd.f32 0.0, %v1033
        %v1035 = vpop.f32.mrb[0].mxu0
        %v1036 = vpop.f32.mrb[0].mxu0
        %v1037 = vadd.f32 0.0, %v1036
        %v1038 = vpop.f32.mrb[0].mxu0
        %1039 = vdwg.mxu0
        %v1040 = vpack.c.bf16 %v1029, %v1026
        %v1041 = vpack.c.bf16 %v1037, %v1034
        %v1042 = vld [vmem:[%s4 + $0x8] sm:$0xf]
        %v1044 = vsel %vm372, %v1040, 0
        %v1047 = vsel %vm372, %v1041, 0
        %v1050 = vsel %vm745, %v1042, 0
        %1052 = vmatprep.subr.bf16.mxu0 0
        %1053 = vmatpush1.bf16.msra.mxu0 %v1050
        %1054 = vmatprep.subr.bf16.mxu0 0
        %1055 = vmatpush1.bf16.msra.mxu0 0
        %1056 = vmatprep.subr.bf16.mxu0 0
        %1057 = vmatpush1.bf16.msra.mxu0 0
        %1058 = vmatprep.subr.bf16.mxu0 0
        %1059 = vmatpush1.bf16.msra.mxu0 0
        %1060 = vmatprep.subr.bf16.mxu0 0
        %1061 = vmatpush1.bf16.msra.mxu0 0
        %1062 = vmatprep.subr.bf16.mxu0 0
        %1063 = vmatpush1.bf16.msra.mxu0 0
        %1064 = vmatprep.subr.bf16.mxu0 0
        %1065 = vmatpush1.bf16.msra.mxu0 0
        %1066 = vmatprep.subr.bf16.mxu0 0
        %1067 = vmatpush1.bf16.msra.mxu0 0
        %1068 = vmatprep.subr.bf16.mxu0 0
        %1069 = vmatpush1.bf16.msra.mxu0 0
        %1070 = vmatprep.subr.bf16.mxu0 0
        %1071 = vmatpush1.bf16.msra.mxu0 0
        %1072 = vmatprep.subr.bf16.mxu0 0
        %1073 = vmatpush1.bf16.msra.mxu0 0
        %1074 = vmatprep.subr.bf16.mxu0 0
        %1075 = vmatpush1.bf16.msra.mxu0 0
        %1076 = vmatprep.subr.bf16.mxu0 0
        %1077 = vmatpush1.bf16.msra.mxu0 0
        %1078 = vmatprep.subr.bf16.mxu0 0
        %1079 = vmatpush1.bf16.msra.mxu0 0
        %1080 = vmatprep.subr.bf16.mxu0 0
        %1081 = vmatpush1.bf16.msra.mxu0 0
        %1082 = vmatprep.subr.bf16.mxu0 0
        %1083 = vmatpush1.bf16.msra.mxu0 0
        %1084 = vmatprep.mubr.bf16.mxu0 0
        %1085 = vmatmul.mubr.bf16.gmra.mrb[0].mxu0 %v1044
        %v1086 = vpop.f32.mrb[0].mxu0
        %v1087 = vadd.f32 0.0, %v1086
        %v1088 = vpop.f32.mrb[0].mxu0
        %v1089 = vpop.f32.mrb[0].mxu0
        %v1090 = vadd.f32 0.0, %v1089
        %v1091 = vpop.f32.mrb[0].mxu0
        %1092 = vmatprep.mubr.bf16.mxu0 0
        %1093 = vmatmul.mubr.bf16.gmra.mrb[0].mxu0 %v1047
        %v1094 = vpop.f32.mrb[0].mxu0
        %v1095 = vadd.f32 0.0, %v1094
        %v1096 = vpop.f32.mrb[0].mxu0
        %v1097 = vpop.f32.mrb[0].mxu0
        %v1098 = vadd.f32 0.0, %v1097
        %v1099 = vpop.f32.mrb[0].mxu0
        %1100 = vdwg.mxu0
        %v1101 = vadd.f32 %v842, %v1087
        %v1102 = vadd.f32 %v845, %v1090
        %v1103 = vadd.f32 %v850, %v1095
        %v1104 = vadd.f32 %v853, %v1098
        %1105 = vrot.lane.b32.xlu0 %v364, 104
        %v1106 = vpop.permute.xlu0 %1105
        %1107 = vrot.lane.b32.xlu0 %v365, 104
        %v1108 = vpop.permute.xlu0 %1107
        %1109 = vrot.lane.b32.xlu0 %v364, 72
        %v1110 = vpop.permute.xlu0 %1109
        %1111 = vrot.lane.b32.xlu0 %v365, 72
        %v1112 = vpop.permute.xlu0 %1111
        %v1114 = vsel %vm372, %v1106, 0
        %v1117 = vsel %vm372, %v1108, 0
        %v1120 = vsel %vm372, %v1110, 0
        %v1123 = vsel %vm372, %v1112, 0
        %1125 = vmatprep.subr.bf16.mxu0 0
        %1126 = vmatpush1.bf16.xpose.msra.mxu0 %v1120
        %1127 = vmatprep.subr.bf16.mxu0 0
        %1128 = vmatpush1.bf16.xpose.msra.mxu0 %v1123
        %1129 = vmatprep.subr.bf16.mxu0 0
        %1130 = vmatpush1.bf16.xpose.msra.mxu0 0
        %1131 = vmatprep.subr.bf16.mxu0 0
        %1132 = vmatpush1.bf16.xpose.msra.mxu0 0
        %1133 = vmatprep.subr.bf16.mxu0 0
        %1134 = vmatpush1.bf16.xpose.msra.mxu0 0
        %1135 = vmatprep.subr.bf16.mxu0 0
        %1136 = vmatpush1.bf16.xpose.msra.mxu0 0
        %1137 = vmatprep.subr.bf16.mxu0 0
        %1138 = vmatpush1.bf16.xpose.msra.mxu0 0
        %1139 = vmatprep.subr.bf16.mxu0 0
        %1140 = vmatpush1.bf16.xpose.msra.mxu0 0
        %1141 = vmatprep.subr.bf16.mxu0 0
        %1142 = vmatpush1.bf16.xpose.msra.mxu0 0
        %1143 = vmatprep.subr.bf16.mxu0 0
        %1144 = vmatpush1.bf16.xpose.msra.mxu0 0
        %1145 = vmatprep.subr.bf16.mxu0 0
        %1146 = vmatpush1.bf16.xpose.msra.mxu0 0
        %1147 = vmatprep.subr.bf16.mxu0 0
        %1148 = vmatpush1.bf16.xpose.msra.mxu0 0
        %1149 = vmatprep.subr.bf16.mxu0 0
        %1150 = vmatpush1.bf16.xpose.msra.mxu0 0
        %1151 = vmatprep.subr.bf16.mxu0 0
        %1152 = vmatpush1.bf16.xpose.msra.mxu0 0
        %1153 = vmatprep.subr.bf16.mxu0 0
        %1154 = vmatpush1.bf16.xpose.msra.mxu0 0
        %1155 = vmatprep.subr.bf16.mxu0 0
        %1156 = vmatpush1.bf16.xpose.msra.mxu0 0
        %1157 = vmatprep.mubr.bf16.mxu0 0
        %1158 = vmatmul.mubr.bf16.gmra.mrb[0].mxu0 %v1114
        %v1159 = vpop.f32.mrb[0].mxu0
        %v1160 = vadd.f32 0.0, %v1159
        %v1161 = vpop.f32.mrb[0].mxu0
        %v1162 = vpop.f32.mrb[0].mxu0
        %v1163 = vadd.f32 0.0, %v1162
        %v1164 = vpop.f32.mrb[0].mxu0
        %1165 = vmatprep.mubr.bf16.mxu0 0
        %1166 = vmatmul.mubr.bf16.gmra.mrb[0].mxu0 %v1117
        %v1167 = vpop.f32.mrb[0].mxu0
        %v1168 = vadd.f32 0.0, %v1167
        %v1169 = vpop.f32.mrb[0].mxu0
        %v1170 = vpop.f32.mrb[0].mxu0
        %v1171 = vadd.f32 0.0, %v1170
        %v1172 = vpop.f32.mrb[0].mxu0
        %1173 = vdwg.mxu0
        %v1174 = vmul.f32 %v1160, 0.35355338
        %v1175 = vmul.f32 %v1163, 0.35355338
        %v1176 = vmul.f32 %v1168, 0.35355338
        %v1177 = vmul.f32 %v1171, 0.35355338
        %v1178 = vadd.f32 %v1174, %v278
        %v1179 = vadd.f32 %v1175, %v279
        %v1180 = vadd.f32 %v1176, %v280
        %v1181 = vadd.f32 %v1177, %v281
        %v1182 = vsel %vm307, %v1178, -inf
        %1183 = vmax.xlane.f32.xlu0 %v1182
        %v1184 = vpop.xlane.xlu0 %1183
        %v1185 = vsel %vm307, %v1179, -inf
        %1186 = vmax.xlane.f32.xlu0 %v1185
        %v1187 = vpop.xlane.xlu0 %1186
        %v1188 = vsel %vm307, %v1180, -inf
        %1189 = vmax.xlane.f32.xlu0 %v1188
        %v1190 = vpop.xlane.xlu0 %1189
        %v1191 = vsel %vm307, %v1181, -inf
        %1192 = vmax.xlane.f32.xlu0 %v1191
        %v1193 = vpop.xlane.xlu0 %1192
        %v1194 = vsub.f32 %v1178, %v1184
        %v1195 = vsub.f32 %v1179, %v1187
        %v1196 = vsub.f32 %v1180, %v1190
        %v1197 = vsub.f32 %v1181, %v1193
        %v1198 = vmul.f32 %v1194, 1.442695
        %v1199 = vpow.pop %v1198
        %v1200 = vmul.f32 %v1195, 1.442695
        %v1201 = vpow.pop %v1200
        %v1202 = vmul.f32 %v1196, 1.442695
        %v1203 = vpow.pop %v1202
        %v1204 = vmul.f32 %v1197, 1.442695
        %v1205 = vpow.pop %v1204
        %v1206 = vsel %vm307, %v1199, 0.0
        %1207 = vadd.xlane.f32.xlu0 %v1206
        %v1208 = vpop.xlane.xlu0 %1207
        %v1209 = vsel %vm307, %v1201, 0.0
        %1210 = vadd.xlane.f32.xlu0 %v1209
        %v1211 = vpop.xlane.xlu0 %1210
        %v1212 = vsel %vm307, %v1203, 0.0
        %1213 = vadd.xlane.f32.xlu0 %v1212
        %v1214 = vpop.xlane.xlu0 %1213
        %v1215 = vsel %vm307, %v1205, 0.0
        %1216 = vadd.xlane.f32.xlu0 %v1215
        %v1217 = vpop.xlane.xlu0 %1216
        %v1218 = vrcp.pop %v1208
        %v1219 = vrcp.pop %v1211
        %v1220 = vrcp.pop %v1214
        %v1221 = vrcp.pop %v1217
        %v1222 = vmul.f32 %v1199, %v1218
        %v1223 = vmul.f32 %v1201, %v1219
        %v1224 = vmul.f32 %v1203, %v1220
        %v1225 = vmul.f32 %v1205, %v1221
        %v1226 = vpack.c.bf16 %v1223, %v1222
        %v1227 = vpack.c.bf16 %v1225, %v1224
        %1228 = vrot.lane.b32.xlu0 %v364, 40
        %v1229 = vpop.permute.xlu0 %1228
        %1230 = vrot.lane.b32.xlu0 %v365, 40
        %v1231 = vpop.permute.xlu0 %1230
        %v1235 = vsel %vm307, %v1226, 0
        %v1238 = vsel %vm307, %v1227, 0
        %1240 = vmatprep.subr.bf16.mxu0 0
        %1241 = vmatpush1.bf16.msra.mxu0 %v1229
        %1242 = vmatprep.subr.bf16.mxu0 0
        %1243 = vmatpush1.bf16.msra.mxu0 %v1231
        %1244 = vmatprep.subr.bf16.mxu0 0
        %1245 = vmatpush1.bf16.msra.mxu0 0
        %1246 = vmatprep.subr.bf16.mxu0 0
        %1247 = vmatpush1.bf16.msra.mxu0 0
        %1248 = vmatprep.subr.bf16.mxu0 0
        %1249 = vmatpush1.bf16.msra.mxu0 0
        %1250 = vmatprep.subr.bf16.mxu0 0
        %1251 = vmatpush1.bf16.msra.mxu0 0
        %1252 = vmatprep.subr.bf16.mxu0 0
        %1253 = vmatpush1.bf16.msra.mxu0 0
        %1254 = vmatprep.subr.bf16.mxu0 0
        %1255 = vmatpush1.bf16.msra.mxu0 0
        %1256 = vmatprep.subr.bf16.mxu0 0
        %1257 = vmatpush1.bf16.msra.mxu0 0
        %1258 = vmatprep.subr.bf16.mxu0 0
        %1259 = vmatpush1.bf16.msra.mxu0 0
        %1260 = vmatprep.subr.bf16.mxu0 0
        %1261 = vmatpush1.bf16.msra.mxu0 0
        %1262 = vmatprep.subr.bf16.mxu0 0
        %1263 = vmatpush1.bf16.msra.mxu0 0
        %1264 = vmatprep.subr.bf16.mxu0 0
        %1265 = vmatpush1.bf16.msra.mxu0 0
        %1266 = vmatprep.subr.bf16.mxu0 0
        %1267 = vmatpush1.bf16.msra.mxu0 0
        %1268 = vmatprep.subr.bf16.mxu0 0
        %1269 = vmatpush1.bf16.msra.mxu0 0
        %1270 = vmatprep.subr.bf16.mxu0 0
        %1271 = vmatpush1.bf16.msra.mxu0 0
        %1272 = vmatprep.mubr.bf16.mxu0 0
        %1273 = vmatmul.mubr.bf16.gmra.mrb[0].mxu0 %v1235
        %v1274 = vpop.f32.mrb[0].mxu0
        %v1275 = vadd.f32 0.0, %v1274
        %v1276 = vpop.f32.mrb[0].mxu0
        %v1277 = vpop.f32.mrb[0].mxu0
        %v1278 = vadd.f32 0.0, %v1277
        %v1279 = vpop.f32.mrb[0].mxu0
        %1280 = vmatprep.mubr.bf16.mxu0 0
        %1281 = vmatmul.mubr.bf16.gmra.mrb[0].mxu0 %v1238
        %v1282 = vpop.f32.mrb[0].mxu0
        %v1283 = vadd.f32 0.0, %v1282
        %v1284 = vpop.f32.mrb[0].mxu0
        %v1285 = vpop.f32.mrb[0].mxu0
        %v1286 = vadd.f32 0.0, %v1285
        %v1287 = vpop.f32.mrb[0].mxu0
        %1288 = vdwg.mxu0
        %v1289 = vpack.c.bf16 %v1278, %v1275
        %v1290 = vpack.c.bf16 %v1286, %v1283
        %v1291 = vld [vmem:[%s4 + $0xc] sm:$0xf]
        %v1293 = vsel %vm372, %v1289, 0
        %v1296 = vsel %vm372, %v1290, 0
        %v1299 = vsel %vm745, %v1291, 0
        %1301 = vmatprep.subr.bf16.mxu0 0
        %1302 = vmatpush1.bf16.msra.mxu0 %v1299
        %1303 = vmatprep.subr.bf16.mxu0 0
        %1304 = vmatpush1.bf16.msra.mxu0 0
        %1305 = vmatprep.subr.bf16.mxu0 0
        %1306 = vmatpush1.bf16.msra.mxu0 0
        %1307 = vmatprep.subr.bf16.mxu0 0
        %1308 = vmatpush1.bf16.msra.mxu0 0
        %1309 = vmatprep.subr.bf16.mxu0 0
        %1310 = vmatpush1.bf16.msra.mxu0 0
        %1311 = vmatprep.subr.bf16.mxu0 0
        %1312 = vmatpush1.bf16.msra.mxu0 0
        %1313 = vmatprep.subr.bf16.mxu0 0
        %1314 = vmatpush1.bf16.msra.mxu0 0
        %1315 = vmatprep.subr.bf16.mxu0 0
        %1316 = vmatpush1.bf16.msra.mxu0 0
        %1317 = vmatprep.subr.bf16.mxu0 0
        %1318 = vmatpush1.bf16.msra.mxu0 0
        %1319 = vmatprep.subr.bf16.mxu0 0
        %1320 = vmatpush1.bf16.msra.mxu0 0
        %1321 = vmatprep.subr.bf16.mxu0 0
        %1322 = vmatpush1.bf16.msra.mxu0 0
        %1323 = vmatprep.subr.bf16.mxu0 0
        %1324 = vmatpush1.bf16.msra.mxu0 0
        %1325 = vmatprep.subr.bf16.mxu0 0
        %1326 = vmatpush1.bf16.msra.mxu0 0
        %1327 = vmatprep.subr.bf16.mxu0 0
        %1328 = vmatpush1.bf16.msra.mxu0 0
        %1329 = vmatprep.subr.bf16.mxu0 0
        %1330 = vmatpush1.bf16.msra.mxu0 0
        %1331 = vmatprep.subr.bf16.mxu0 0
        %1332 = vmatpush1.bf16.msra.mxu0 0
        %1333 = vmatprep.mubr.bf16.mxu0 0
        %1334 = vmatmul.mubr.bf16.gmra.mrb[0].mxu0 %v1293
        %v1335 = vpop.f32.mrb[0].mxu0
        %v1336 = vadd.f32 0.0, %v1335
        %v1337 = vpop.f32.mrb[0].mxu0
        %v1338 = vpop.f32.mrb[0].mxu0
        %v1339 = vadd.f32 0.0, %v1338
        %v1340 = vpop.f32.mrb[0].mxu0
        %1341 = vmatprep.mubr.bf16.mxu0 0
        %1342 = vmatmul.mubr.bf16.gmra.mrb[0].mxu0 %v1296
        %v1343 = vpop.f32.mrb[0].mxu0
        %v1344 = vadd.f32 0.0, %v1343
        %v1345 = vpop.f32.mrb[0].mxu0
        %v1346 = vpop.f32.mrb[0].mxu0
        %v1347 = vadd.f32 0.0, %v1346
        %v1348 = vpop.f32.mrb[0].mxu0
        %1349 = vdwg.mxu0
        %v1350 = vadd.f32 %v1101, %v1336
        %v1351 = vadd.f32 %v1102, %v1339
        %v1352 = vadd.f32 %v1103, %v1344
        %v1353 = vadd.f32 %v1104, %v1347
        %v1354 = vlaneseq
        %v1355 = vshrl.u32 %v1354, 7
        %v1356 = vsub.s32 0, %v1355
        %v1357 = vrot.slane %v363, %v1356
        %v1358 = vadd.f32 %v1350, %v1357
        %v1359 = vadd.f32 %v1351, %v1357
        %v1360 = vadd.f32 %v1352, %v1357
        %v1361 = vadd.f32 %v1353, %v1357
        %v1362 = vadd.f32 %v1358, %v274
        %v1363 = vadd.f32 %v1359, %v275
        %v1364 = vadd.f32 %v1360, %v276
        %v1365 = vadd.f32 %v1361, %v277
        %v1366 = vsel %vm307, %v1362, 0.0
        %1367 = vadd.xlane.f32.xlu0 %v1366
        %v1368 = vpop.xlane.xlu0 %1367
        %v1369 = vsel %vm307, %v1363, 0.0
        %1370 = vadd.xlane.f32.xlu0 %v1369
        %v1371 = vpop.xlane.xlu0 %1370
        %v1372 = vsel %vm307, %v1364, 0.0
        %1373 = vadd.xlane.f32.xlu0 %v1372
        %v1374 = vpop.xlane.xlu0 %1373
        %v1375 = vsel %vm307, %v1365, 0.0
        %1376 = vadd.xlane.f32.xlu0 %v1375
        %v1377 = vpop.xlane.xlu0 %1376
        %v1378 = vrcp.pop 32.0
        %v1379 = vmul.f32 %v1368, %v1378
        %v1380 = vmul.f32 %v1371, %v1378
        %v1381 = vmul.f32 %v1374, %v1378
        %v1382 = vmul.f32 %v1377, %v1378
        %v1383 = vsub.f32 %v1362, %v1379
        %v1384 = vsub.f32 %v1363, %v1380
        %v1385 = vsub.f32 %v1364, %v1381
        %v1386 = vsub.f32 %v1365, %v1382
        %v1387 = vmul.f32 %v1383, %v1383
        %v1388 = vmul.f32 %v1384, %v1384
        %v1389 = vmul.f32 %v1385, %v1385
        %v1390 = vmul.f32 %v1386, %v1386
        %v1391 = vsel %vm307, %v1387, 0.0
        %1392 = vadd.xlane.f32.xlu0 %v1391
        %v1393 = vpop.xlane.xlu0 %1392
        %v1394 = vsel %vm307, %v1388, 0.0
        %1395 = vadd.xlane.f32.xlu0 %v1394
        %v1396 = vpop.xlane.xlu0 %1395
        %v1397 = vsel %vm307, %v1389, 0.0
        %1398 = vadd.xlane.f32.xlu0 %v1397
        %v1399 = vpop.xlane.xlu0 %1398
        %v1400 = vsel %vm307, %v1390, 0.0
        %1401 = vadd.xlane.f32.xlu0 %v1400
        %v1402 = vpop.xlane.xlu0 %1401
        %v1403 = vmul.f32 %v1393, %v1378
        %v1404 = vmul.f32 %v1396, %v1378
        %v1405 = vmul.f32 %v1399, %v1378
        %v1406 = vmul.f32 %v1402, %v1378
        %v1407 = vadd.f32 %v1403, 1e-12
        %v1408 = vadd.f32 %v1404, 1e-12
        %v1409 = vadd.f32 %v1405, 1e-12
        %v1410 = vadd.f32 %v1406, 1e-12
        %v1411 = vrsqrt.pop %v1407
        %v1412 = vrsqrt.pop %v1408
        %v1413 = vrsqrt.pop %v1409
        %v1414 = vrsqrt.pop %v1410
        %v1415 = vmul.f32 %v1383, %v1411
        %v1416 = vmul.f32 %v1384, %v1412
        %v1417 = vmul.f32 %v1385, %v1413
        %v1418 = vmul.f32 %v1386, %v1414
        %v1419 = vlaneseq
        %v1420 = vshrl.u32 %v1419, 7
        %v1421 = vsub.s32 1, %v1420
        %v1422 = vrot.slane %v363, %v1421
        %v1423 = vmul.f32 %v1422, %v1415
        %v1424 = vmul.f32 %v1422, %v1416
        %v1425 = vmul.f32 %v1422, %v1417
        %v1426 = vmul.f32 %v1422, %v1418
        %v1427 = vlaneseq
        %v1428 = vshrl.u32 %v1427, 7
        %v1429 = vsub.s32 2, %v1428
        %v1430 = vrot.slane %v363, %v1429
        %v1431 = vadd.f32 %v1423, %v1430
        %v1432 = vadd.f32 %v1424, %v1430
        %v1433 = vadd.f32 %v1425, %v1430
        %v1434 = vadd.f32 %v1426, %v1430
        %1435 = vst.msk [vmem:[%s260] sm:$0xff] %vm307, %v1431
        %1436 = vst.msk [vmem:[%s260 + $0x8] sm:$0xff] %vm307, %v1432
        %1437 = vst.msk [vmem:[%s260 + $0x10] sm:$0xff] %vm307, %v1433
        %1438 = vst.msk [vmem:[%s260 + $0x18] sm:$0xff] %vm307, %v1434
        %s1439 = sand.u32 %s164, 1
        %s1440 = scalar_lea.sflag [#allocation3], %s1439
        %s1441 = sand.u32 %s164, 1
        %s1442 = smul.addr %s1441, 32
        %s1443 = scalar_lea.vmem [#allocation2], %s1442
        // Predicated region
        $region45: #{transformer_attention.1} parent=43 // pred_check
          %p1444 = pneg %p174
        $region46: #{transformer_attention.1} parent=43 // pred_check_branch
          %1446 = sbr.rel (%p1444) target = $region48
        $region47: #{transformer_attention.1} parent=43 // pred_region
          %s1447 = smul.u32 4, %s20
          %s1449 = ssub.s32 512, 512
          %1450 = vsyncadd %s1440, %s1449
          %s1451 = smul.addr %s1447, 128
          %s1452 = scalar_lea.hbm %s6, %s1451
          %s1453 = sshll.u32 %s1443, 4
          %s1454 = int_to_ptr.vmem [resolvable:$true] %s1453
          %1459 = dma.vmem_to_hbm [thread:$0]  %s1454, 512, %s1452, %s1440, 128, 128, 8
        $region48: #{transformer_attention.1} parent=43 // pred_fallthru
          _
      $region44: #{transformer_attention.1} parent=5 // pred_fallthru
        _
      %p1460 = scmp.le.s32.totalorder 2, %s15
      // Predicated region
      $region49: #{transformer_attention.1} parent=5 // pred_check
        %p1461 = pneg %p1460
      $region50: #{transformer_attention.1} parent=5 // pred_check_branch
        %1463 = sbr.rel (%p1461) target = $region52
      $region51: #{transformer_attention.1} parent=5 // pred_region
        %s1464 = ssub.s32 %s15, 2
        // Predicated region
        $region53: #{transformer_attention.1} parent=51 // pred_check
          %p1465 = pneg %p180
        $region54: #{transformer_attention.1} parent=51 // pred_check_branch
          %1467 = sbr.rel (%p1465) target = $region56
        $region55: #{transformer_attention.1} parent=51 // pred_region
          %s1468 = sand.u32 %s165, 1
          %s1469 = scalar_lea.sflag [#allocation3], %s1468
          %s1470 = sand.u32 %s165, 1
          %s1471 = smul.addr %s1470, 32
          %s1472 = scalar_lea.vmem [#allocation2], %s1471
          %1473 = dma.done %s1469, 512
        $region56: #{transformer_attention.1} parent=51 // pred_fallthru
          _
      $region52: #{transformer_attention.1} parent=5 // pred_fallthru
        _
    $region6: #{transformer_attention.1} parent=1 // loop_footer
      %s19 = sadd.s32 1, %s15
    $region7: #{transformer_attention.1} parent=1 // loop_footer_branch
      %14 = sbr.rel target = $region3
    $region8: #{transformer_attention.1} parent=1 // loop_exit
      _
    %1474 = vsyncpa [#allocation3], 1
    %s1475 = scalar_lea.sflag [#allocation3], 1
    %1476 = vsyncpa %s1475, 1

</llo_original>
